<compile_context>
chip_gen: v7x
topology: tpu7x:2x2x1
jax: 0.10.0
libtpu: 0.0.40
codegen_flags: <defaults>
</compile_context>

<pallas_src>
import functools

import jax
import jax.numpy as jnp
from jax.experimental import pallas as pl
from jax.experimental.pallas import tpu as pltpu

BN_EPS = 1e-5
H = 400          # logical hidden size (PyTorch module)
H_PAD = 512      # lane-padded hidden size used on-chip
MAX_TM = 512     # batch tile (multiple of 256 -> MXU friendly on v6e/v7x)


def _ceil_to(a, m):
    return ((a + m - 1) // m) * m


def _vmem_limit_bytes(tm, k_in):
    """Right-sized scoped-VMEM request for one layer call (with headroom)."""
    act = 2 * (2 * tm * H_PAD * 2)            # bf16 in+out tiles, double buffered
    xin = 2 * tm * max(k_in, H_PAD) * 4       # f32 input tile bound (layer 1)
    wts = 2 * H_PAD * H_PAD * 2               # resident bf16 weight (+ spare buf)
    tmp = 3 * tm * H_PAD * 4                  # live f32 temporaries (h, a, h*h)
    need = act + xin + wts + tmp + (2 << 20)
    return int(min(max(need * 3 // 2, 16 << 20), 100 << 20))


def _compiler_params(tm, k_in):
    return pltpu.CompilerParams(
        dimension_semantics=("parallel",),
        vmem_limit_bytes=_vmem_limit_bytes(tm, k_in))


# ----------------------------------------------------------------------------
# Kernels
# ----------------------------------------------------------------------------
def _lin_stats_kernel(x_ref, w_ref, h_ref, sum_ref, sumsq_ref):
    """h = x @ w (bf16 MXU, f32 acc); bf16 activation tile + column stats."""
    h = jnp.dot(x_ref[...].astype(jnp.bfloat16), w_ref[...],
                preferred_element_type=jnp.float32)
    h_ref[...] = h.astype(h_ref.dtype)
    sum_ref[0] = jnp.sum(h, axis=0, keepdims=True)
    sumsq_ref[0] = jnp.sum(h * h, axis=0, keepdims=True)


def _bn_lin_stats_kernel(h_in_ref, scale_ref, shift_ref, w_ref,
                         h_ref, sum_ref, sumsq_ref, *, n_true, tm, mask_rows):
    """a = relu(h_in*scale+shift); h = a @ w; bf16 h tile + column stats."""
    a = h_in_ref[...].astype(jnp.float32) * scale_ref[...] + shift_ref[...]
    a = jnp.maximum(a, 0.0)
    if mask_rows:
        # Zero batch-padding rows so they cannot pollute the next layer stats.
        rows = pl.program_id(0) * tm + jax.lax.broadcasted_iota(
            jnp.int32, a.shape, 0)
        a = jnp.where(rows < n_true, a, 0.0)
    h = jnp.dot(a.astype(jnp.bfloat16), w_ref[...],
                preferred_element_type=jnp.float32)
    h_ref[...] = h.astype(h_ref.dtype)
    sum_ref[0] = jnp.sum(h, axis=0, keepdims=True)
    sumsq_ref[0] = jnp.sum(h * h, axis=0, keepdims=True)


def _bn_head_kernel(h_in_ref, scale_ref, shift_ref, w4_ref, b4_ref, o_ref):
    """a = relu(h_in*scale+shift); out = a @ w4 + b4, lane-dense (8,TM) tile."""
    a = jnp.maximum(
        h_in_ref[...].astype(jnp.float32) * scale_ref[...] + shift_ref[...], 0.0)
    # w4 is padded to 8 rows (row 0 real): (8,H_PAD) x (TM,H_PAD)^T -> (8,TM).
    out = jnp.einsum("od,nd->on", w4_ref[...], a,
                     preferred_element_type=jnp.float32)
    o_ref[0] = out + b4_ref[...]


# ----------------------------------------------------------------------------
# pallas_call builders
# ----------------------------------------------------------------------------
def _lin_stats_call(x, w, *, tm, g):
    n_pad, k_in = x.shape
    return pl.pallas_call(
        _lin_stats_kernel,
        grid=(g,),
        in_specs=[
            pl.BlockSpec((tm, k_in), lambda i: (i, 0)),
            pl.BlockSpec((k_in, H_PAD), lambda i: (0, 0)),
        ],
        out_specs=[
            pl.BlockSpec((tm, H_PAD), lambda i: (i, 0)),
            pl.BlockSpec((1, 1, H_PAD), lambda i: (i, 0, 0)),
            pl.BlockSpec((1, 1, H_PAD), lambda i: (i, 0, 0)),
        ],
        out_shape=[
            jax.ShapeDtypeStruct((n_pad, H_PAD), jnp.bfloat16),
            jax.ShapeDtypeStruct((g, 1, H_PAD), jnp.float32),
            jax.ShapeDtypeStruct((g, 1, H_PAD), jnp.float32),
        ],
        compiler_params=_compiler_params(tm, k_in),
    )(x, w)


def _bn_lin_stats_call(h_in, scale, shift, w, *, tm, g, n_true, mask_rows):
    n_pad = h_in.shape[0]
    kern = functools.partial(_bn_lin_stats_kernel,
                             n_true=n_true, tm=tm, mask_rows=mask_rows)
    return pl.pallas_call(
        kern,
        grid=(g,),
        in_specs=[
            pl.BlockSpec((tm, H_PAD), lambda i: (i, 0)),
            pl.BlockSpec((1, H_PAD), lambda i: (0, 0)),
            pl.BlockSpec((1, H_PAD), lambda i: (0, 0)),
            pl.BlockSpec((H_PAD, H_PAD), lambda i: (0, 0)),
        ],
        out_specs=[
            pl.BlockSpec((tm, H_PAD), lambda i: (i, 0)),
            pl.BlockSpec((1, 1, H_PAD), lambda i: (i, 0, 0)),
            pl.BlockSpec((1, 1, H_PAD), lambda i: (i, 0, 0)),
        ],
        out_shape=[
            jax.ShapeDtypeStruct((n_pad, H_PAD), jnp.bfloat16),
            jax.ShapeDtypeStruct((g, 1, H_PAD), jnp.float32),
            jax.ShapeDtypeStruct((g, 1, H_PAD), jnp.float32),
        ],
        compiler_params=_compiler_params(tm, H_PAD),
    )(h_in, scale, shift, w)


def _bn_head_call(h_in, scale, shift, w4, b4, *, tm, g):
    return pl.pallas_call(
        _bn_head_kernel,
        grid=(g,),
        in_specs=[
            pl.BlockSpec((tm, H_PAD), lambda i: (i, 0)),
            pl.BlockSpec((1, H_PAD), lambda i: (0, 0)),
            pl.BlockSpec((1, H_PAD), lambda i: (0, 0)),
            pl.BlockSpec((8, H_PAD), lambda i: (0, 0)),
            pl.BlockSpec((1, 1), lambda i: (0, 0)),
        ],
        out_specs=pl.BlockSpec((1, 8, tm), lambda i: (i, 0, 0)),
        out_shape=jax.ShapeDtypeStruct((g, 8, tm), jnp.float32),
        compiler_params=_compiler_params(tm, H_PAD),
    )(h_in, scale, shift, w4, b4)


# ----------------------------------------------------------------------------
# Host-side wrapper
# ----------------------------------------------------------------------------
def _bn_scale_shift(sum_partials, sumsq_partials, gamma, beta, n_true):
    """Fused train-mode BN scale/shift from single-pass column statistics."""
    col_sum = jnp.sum(sum_partials, axis=(0, 1))
    col_sumsq = jnp.sum(sumsq_partials, axis=(0, 1))
    mean = col_sum / n_true
    var = jnp.maximum(col_sumsq / n_true - mean * mean, 0.0)
    pad = H_PAD - gamma.shape[0]
    gp = jnp.pad(gamma.astype(jnp.float32), (0, pad))
    bp = jnp.pad(beta.astype(jnp.float32), (0, pad))
    scale = gp * jax.lax.rsqrt(var + BN_EPS)
    shift = bp - mean * scale
    return scale.reshape(1, H_PAD), shift.reshape(1, H_PAD)


def mine_t_forward(x, params):
    """Forward pass of T (train-mode BatchNorm). Returns (N, 1) float32."""
    w1, g1, b1, w2, g2, b2, w3, g3, b3, w4, b4 = params
    n, f = x.shape

    # Batch tiling: one tile if N<=512 (rounded to 8 sublanes), else TM=512.
    tm = _ceil_to(n, 8) if n <= MAX_TM else MAX_TM
    n_pad = _ceil_to(n, tm)
    g = n_pad // tm
    mask_rows = n_pad != n

    xp = jnp.pad(x, ((0, n_pad - n), (0, 0))) if mask_rows else x

    pad_h = H_PAD - H
    w1p = jnp.pad(w1, ((0, 0), (0, pad_h))).astype(jnp.bfloat16)
    w2p = jnp.pad(w2, ((0, pad_h), (0, pad_h))).astype(jnp.bfloat16)
    w3p = jnp.pad(w3, ((0, pad_h), (0, pad_h))).astype(jnp.bfloat16)
    # w4 (H,1) -> (8, H_PAD) f32; only row 0 is real (lane-dense head output).
    w4p = jnp.pad(w4.reshape(1, H), ((0, 7), (0, pad_h))).astype(jnp.float32)
    b4p = b4.reshape(1, 1).astype(jnp.float32)

    # TODO(synk): cross-call (P10) weight prefetch for the tiny-batch regime,
    # where the ~1 MiB weight DMA dominates the sub-microsecond MXU work.

    h1, s1, ss1 = _lin_stats_call(xp, w1p, tm=tm, g=g)
    sc1, sh1 = _bn_scale_shift(s1, ss1, g1, b1, n)

    h2, s2, ss2 = _bn_lin_stats_call(h1, sc1, sh1, w2p, tm=tm, g=g,
                                     n_true=n, mask_rows=mask_rows)
    sc2, sh2 = _bn_scale_shift(s2, ss2, g2, b2, n)

    h3, s3, ss3 = _bn_lin_stats_call(h2, sc2, sh2, w3p, tm=tm, g=g,
                                     n_true=n, mask_rows=mask_rows)
    sc3, sh3 = _bn_scale_shift(s3, ss3, g3, b3, n)

    out = _bn_head_call(h3, sc3, sh3, w4p, b4p, tm=tm, g=g)    # (g, 8, tm)
    return out[:, 0, :].reshape(n_pad)[:n].reshape(n, 1)


# ----------------------------------------------------------------------------
# Parameter init (PyTorch-like) and references
# ----------------------------------------------------------------------------
def init_params(key, in_feature, hidden=H):
    ks = jax.random.split(key, 5)

    def lin(k, fan_in, fan_out):
        bound = 1.0 / jnp.sqrt(fan_in)
        return jax.random.uniform(k, (fan_in, fan_out), jnp.float32, -bound, bound)

    w1 = lin(ks[0], in_feature, hidden)
    w2 = lin(ks[1], hidden, hidden)
    w3 = lin(ks[2], hidden, hidden)
    w4 = lin(ks[3], hidden, 1)
    b4_bound = 1.0 / jnp.sqrt(hidden)
    b4 = jax.random.uniform(ks[4], (1,), jnp.float32, -b4_bound, b4_bound)
    gamma = jnp.ones((hidden,), jnp.float32)
    beta = jnp.zeros((hidden,), jnp.float32)
    return (w1, gamma, beta, w2, gamma, beta, w3, gamma, beta, w4, b4)


def reference_forward(x, params):
    """Full-f32 PyTorch-equivalent math (train-mode BatchNorm, biased var)."""
    w1, g1, b1, w2, g2, b2, w3, g3, b3, w4, b4 = params

    def bn_relu(h, gamma, beta):
        m = jnp.mean(h, axis=0, keepdims=True)
        v = jnp.mean((h - m) ** 2, axis=0, keepdims=True)
        xh = (h - m) * jax.lax.rsqrt(v + BN_EPS)
        return jnp.maximum(xh * gamma[None, :] + beta[None, :], 0.0)

    h = bn_relu(x @ w1, g1, b1)
    h = bn_relu(h @ w2, g2, b2)
    h = bn_relu(h @ w3, g3, b3)
    return h @ w4 + b4[None, :]


def reference_forward_kernel_mirror(x, params):
    """Pure-JAX mirror of the kernel pipeline (bf16 MXU ops, bf16 HBM acts)."""
    w1, g1, b1, w2, g2, b2, w3, g3, b3, w4, b4 = params
    n = x.shape[0]

    def mm(a, w):
        return jnp.dot(a.astype(jnp.bfloat16), w.astype(jnp.bfloat16),
                       preferred_element_type=jnp.float32)

    def scale_shift(h, gamma, beta):
        mean = jnp.sum(h, axis=0) / n
        var = jnp.maximum(jnp.sum(h * h, axis=0) / n - mean * mean, 0.0)
        s = gamma * jax.lax.rsqrt(var + BN_EPS)
        return s[None, :], (beta - mean * s)[None, :]

    def bn_relu(h_bf16, s, t):
        return jnp.maximum(h_bf16.astype(jnp.float32) * s + t, 0.0)

    h1 = mm(x, w1)
    s, t = scale_shift(h1, g1, b1)
    a1 = bn_relu(h1.astype(jnp.bfloat16), s, t)
    h2 = mm(a1, w2)
    s, t = scale_shift(h2, g2, b2)
    a2 = bn_relu(h2.astype(jnp.bfloat16), s, t)
    h3 = mm(a2, w3)
    s, t = scale_shift(h3, g3, b3)
    a3 = bn_relu(h3.astype(jnp.bfloat16), s, t)
    return jnp.dot(a3, w4, preferred_element_type=jnp.float32) + b4[None, :]


# ----------------------------------------------------------------------------
# Self-test
# ----------------------------------------------------------------------------
if __name__ == "__main__":
    key = jax.random.PRNGKey(0)
    k_p, k_a, k_b = jax.random.split(key, 3)

    in_feature = 32
    params = init_params(k_p, in_feature)
    fwd = jax.jit(mine_t_forward)

    # (name, batch): small single-tile case and a multi-tile case exercising
    # the N grid + padded-row masking.
    for name, batch, kx in (("small", 8, k_a), ("tiled", 600, k_b)):
        x = jax.random.normal(kx, (batch, in_feature), jnp.float32)
        out = jax.block_until_ready(fwd(x, params))
        assert out.shape == (batch, 1), (name, out.shape)

        # Tight check vs a reference mirroring the kernel's bf16 pipeline.
        ref_m = reference_forward_kernel_mirror(x, params)
        err_m = float(jnp.max(jnp.abs(out - ref_m)))
        assert jnp.allclose(out, ref_m, atol=5e-3, rtol=5e-3), (name, err_m)

        # Loose sanity check vs the full-f32 PyTorch-equivalent math.
        ref_f = reference_forward(x, params)
        err_f = float(jnp.max(jnp.abs(out - ref_f)))
        assert jnp.allclose(out, ref_f, atol=1e-1, rtol=1e-1), (name, err_f)

    print("KERNEL_OK")
</pallas_src>

<mosaic_0001>
module attributes {stable_mosaic.version = 11 : i64} {
  func.func @_lin_stats_kernel(%arg0: i32, %arg1: memref<8x32xf32, #tpu.memory_space<vmem>>, %arg2: memref<32x512xbf16, #tpu.memory_space<vmem>>, %arg3: memref<8x512xbf16, #tpu.memory_space<vmem>>, %arg4: memref<1x1x512xf32, #tpu.memory_space<vmem>>, %arg5: memref<1x1x512xf32, #tpu.memory_space<vmem>>) attributes {dimension_semantics = [#tpu.dimension_semantics<parallel>], iteration_bounds = array<i64: 1>, scalar_prefetch = 0 : i64, scratch_operands = 0 : i64, tpu.core_type = #tpu.core_type<tc>, window_params = [{transform_indices = @transform_0, window_bounds = array<i64: 8, 32>}, {pipeline_mode = #tpu.pipeline_mode<synchronous>, transform_indices = @transform_1, window_bounds = array<i64: 32, 512>}, {transform_indices = @transform_2, window_bounds = array<i64: 8, 512>}, {transform_indices = @transform_3, window_bounds = array<i64: 1, 1, 512>}, {transform_indices = @transform_4, window_bounds = array<i64: 1, 1, 512>}]} {
    %c0 = arith.constant 0 : index
    %c0_0 = arith.constant 0 : index
    %0 = vector.load %arg1[%c0, %c0_0] : memref<8x32xf32, #tpu.memory_space<vmem>>, vector<8x32xf32>
    %1 = arith.truncf %0 : vector<8x32xf32> to vector<8x32xbf16>
    %c0_1 = arith.constant 0 : index
    %c0_2 = arith.constant 0 : index
    %2 = vector.load %arg2[%c0_1, %c0_2] : memref<32x512xbf16, #tpu.memory_space<vmem>>, vector<32x512xbf16>
    %cst = arith.constant dense<0.000000e+00> : vector<8x512xf32>
    %3 = tpu.matmul %1, %2, %cst {dimension_numbers = #tpu.dot_dimension_numbers<[1], [0], [0], [1], [0, 0, 1, 1], [], []>} : vector<8x32xbf16>, vector<32x512xbf16>, vector<8x512xf32> -> vector<8x512xf32>
    %4 = arith.truncf %3 : vector<8x512xf32> to vector<8x512xbf16>
    %c0_3 = arith.constant 0 : index
    %c0_4 = arith.constant 0 : index
    %5 = vector.load %arg3[%c0_3, %c0_4] : memref<8x512xbf16, #tpu.memory_space<vmem>>, vector<8x512xbf16>
    tpu.vector_store %arg3[%c0_3, %c0_4], %4 {strides = array<i32>} : memref<8x512xbf16, #tpu.memory_space<vmem>>, vector<8x512xbf16>,
    %cst_5 = arith.constant dense<0.000000e+00> : vector<512xf32>
    %6 = vector.multi_reduction <add>, %3, %cst_5 [0] : vector<8x512xf32> to vector<512xf32>
    %7 = vector.shape_cast %6 : vector<512xf32> to vector<1x512xf32>
    %c0_6 = arith.constant 0 : index
    %c0_7 = arith.constant 0 : index
    %c0_8 = arith.constant 0 : index
    %8 = vector.load %arg4[%c0_6, %c0_7, %c0_8] : memref<1x1x512xf32, #tpu.memory_space<vmem>>, vector<1x1x512xf32>
    %9 = vector.shape_cast %8 : vector<1x1x512xf32> to vector<1x512xf32>
    %10 = vector.shape_cast %7 : vector<1x512xf32> to vector<1x1x512xf32>
    tpu.vector_store %arg4[%c0_6, %c0_7, %c0_8], %10 {strides = array<i32>} : memref<1x1x512xf32, #tpu.memory_space<vmem>>, vector<1x1x512xf32>,
    %11 = arith.mulf %3, %3 : vector<8x512xf32>
    %cst_9 = arith.constant dense<0.000000e+00> : vector<512xf32>
    %12 = vector.multi_reduction <add>, %11, %cst_9 [0] : vector<8x512xf32> to vector<512xf32>
    %13 = vector.shape_cast %12 : vector<512xf32> to vector<1x512xf32>
    %c0_10 = arith.constant 0 : index
    %c0_11 = arith.constant 0 : index
    %c0_12 = arith.constant 0 : index
    %14 = vector.load %arg5[%c0_10, %c0_11, %c0_12] : memref<1x1x512xf32, #tpu.memory_space<vmem>>, vector<1x1x512xf32>
    %15 = vector.shape_cast %14 : vector<1x1x512xf32> to vector<1x512xf32>
    %16 = vector.shape_cast %13 : vector<1x512xf32> to vector<1x1x512xf32>
    tpu.vector_store %arg5[%c0_10, %c0_11, %c0_12], %16 {strides = array<i32>} : memref<1x1x512xf32, #tpu.memory_space<vmem>>, vector<1x1x512xf32>,
    return
  }
  func.func @transform_0(%arg0: i32) -> (i32, i32) {
    %c0_i32 = arith.constant 0 : i32
    %c0_i32_0 = arith.constant 0 : i32
    return %arg0, %c0_i32 : i32, i32
  }
  func.func @transform_1(%arg0: i32) -> (i32, i32) {
    %c0_i32 = arith.constant 0 : i32
    %c0_i32_0 = arith.constant 0 : i32
    %c0_i32_1 = arith.constant 0 : i32
    return %c0_i32, %c0_i32_0 : i32, i32
  }
  func.func @transform_2(%arg0: i32) -> (i32, i32) {
    %c0_i32 = arith.constant 0 : i32
    %c0_i32_0 = arith.constant 0 : i32
    return %arg0, %c0_i32 : i32, i32
  }
  func.func @transform_3(%arg0: i32) -> (i32, i32, i32) {
    %c0_i32 = arith.constant 0 : i32
    %c0_i32_0 = arith.constant 0 : i32
    %c0_i32_1 = arith.constant 0 : i32
    return %arg0, %c0_i32, %c0_i32_0 : i32, i32, i32
  }
  func.func @transform_4(%arg0: i32) -> (i32, i32, i32) {
    %c0_i32 = arith.constant 0 : i32
    %c0_i32_0 = arith.constant 0 : i32
    %c0_i32_1 = arith.constant 0 : i32
    return %arg0, %c0_i32, %c0_i32_0 : i32, i32, i32
  }
}

module attributes {stable_mosaic.version = 11 : i64} {
  func.func @_bn_lin_stats_kernel(%arg0: i32, %arg1: memref<8x512xbf16, #tpu.memory_space<vmem>>, %arg2: memref<1x512xf32, #tpu.memory_space<vmem>>, %arg3: memref<1x512xf32, #tpu.memory_space<vmem>>, %arg4: memref<512x512xbf16, #tpu.memory_space<vmem>>, %arg5: memref<8x512xbf16, #tpu.memory_space<vmem>>, %arg6: memref<1x1x512xf32, #tpu.memory_space<vmem>>, %arg7: memref<1x1x512xf32, #tpu.memory_space<vmem>>) attributes {dimension_semantics = [#tpu.dimension_semantics<parallel>], iteration_bounds = array<i64: 1>, scalar_prefetch = 0 : i64, scratch_operands = 0 : i64, tpu.core_type = #tpu.core_type<tc>, window_params = [{transform_indices = @transform_0, window_bounds = array<i64: 8, 512>}, {pipeline_mode = #tpu.pipeline_mode<synchronous>, transform_indices = @transform_1, window_bounds = array<i64: 1, 512>}, {pipeline_mode = #tpu.pipeline_mode<synchronous>, transform_indices = @transform_2, window_bounds = array<i64: 1, 512>}, {pipeline_mode = #tpu.pipeline_mode<synchronous>, transform_indices = @transform_3, window_bounds = array<i64: 512, 512>}, {transform_indices = @transform_4, window_bounds = array<i64: 8, 512>}, {transform_indices = @transform_5, window_bounds = array<i64: 1, 1, 512>}, {transform_indices = @transform_6, window_bounds = array<i64: 1, 1, 512>}]} {
    %c0 = arith.constant 0 : index
    %c0_0 = arith.constant 0 : index
    %0 = vector.load %arg1[%c0, %c0_0] : memref<8x512xbf16, #tpu.memory_space<vmem>>, vector<8x512xbf16>
    %1 = arith.extf %0 : vector<8x512xbf16> to vector<8x512xf32>
    %c0_1 = arith.constant 0 : index
    %c0_2 = arith.constant 0 : index
    %2 = vector.load %arg2[%c0_1, %c0_2] : memref<1x512xf32, #tpu.memory_space<vmem>>, vector<1x512xf32>
    %3 = vector.broadcast %2 : vector<1x512xf32> to vector<8x512xf32>
    %4 = arith.mulf %1, %3 : vector<8x512xf32>
    %c0_3 = arith.constant 0 : index
    %c0_4 = arith.constant 0 : index
    %5 = vector.load %arg3[%c0_3, %c0_4] : memref<1x512xf32, #tpu.memory_space<vmem>>, vector<1x512xf32>
    %6 = vector.broadcast %5 : vector<1x512xf32> to vector<8x512xf32>
    %7 = arith.addf %4, %6 : vector<8x512xf32>
    %cst = arith.constant 0.000000e+00 : f32
    %8 = vector.broadcast %cst : f32 to vector<8x512xf32>
    %9 = arith.maximumf %7, %8 : vector<8x512xf32>
    %10 = arith.truncf %9 : vector<8x512xf32> to vector<8x512xbf16>
    %c0_5 = arith.constant 0 : index
    %c0_6 = arith.constant 0 : index
    %11 = vector.load %arg4[%c0_5, %c0_6] : memref<512x512xbf16, #tpu.memory_space<vmem>>, vector<512x512xbf16>
    %cst_7 = arith.constant dense<0.000000e+00> : vector<8x512xf32>
    %12 = tpu.matmul %10, %11, %cst_7 {dimension_numbers = #tpu.dot_dimension_numbers<[1], [0], [0], [1], [0, 0, 1, 1], [], []>} : vector<8x512xbf16>, vector<512x512xbf16>, vector<8x512xf32> -> vector<8x512xf32>
    %13 = arith.truncf %12 : vector<8x512xf32> to vector<8x512xbf16>
    %c0_8 = arith.constant 0 : index
    %c0_9 = arith.constant 0 : index
    %14 = vector.load %arg5[%c0_8, %c0_9] : memref<8x512xbf16, #tpu.memory_space<vmem>>, vector<8x512xbf16>
    tpu.vector_store %arg5[%c0_8, %c0_9], %13 {strides = array<i32>} : memref<8x512xbf16, #tpu.memory_space<vmem>>, vector<8x512xbf16>,
    %cst_10 = arith.constant dense<0.000000e+00> : vector<512xf32>
    %15 = vector.multi_reduction <add>, %12, %cst_10 [0] : vector<8x512xf32> to vector<512xf32>
    %16 = vector.shape_cast %15 : vector<512xf32> to vector<1x512xf32>
    %c0_11 = arith.constant 0 : index
    %c0_12 = arith.constant 0 : index
    %c0_13 = arith.constant 0 : index
    %17 = vector.load %arg6[%c0_11, %c0_12, %c0_13] : memref<1x1x512xf32, #tpu.memory_space<vmem>>, vector<1x1x512xf32>
    %18 = vector.shape_cast %17 : vector<1x1x512xf32> to vector<1x512xf32>
    %19 = vector.shape_cast %16 : vector<1x512xf32> to vector<1x1x512xf32>
    tpu.vector_store %arg6[%c0_11, %c0_12, %c0_13], %19 {strides = array<i32>} : memref<1x1x512xf32, #tpu.memory_space<vmem>>, vector<1x1x512xf32>,
    %20 = arith.mulf %12, %12 : vector<8x512xf32>
    %cst_14 = arith.constant dense<0.000000e+00> : vector<512xf32>
    %21 = vector.multi_reduction <add>, %20, %cst_14 [0] : vector<8x512xf32> to vector<512xf32>
    %22 = vector.shape_cast %21 : vector<512xf32> to vector<1x512xf32>
    %c0_15 = arith.constant 0 : index
    %c0_16 = arith.constant 0 : index
    %c0_17 = arith.constant 0 : index
    %23 = vector.load %arg7[%c0_15, %c0_16, %c0_17] : memref<1x1x512xf32, #tpu.memory_space<vmem>>, vector<1x1x512xf32>
    %24 = vector.shape_cast %23 : vector<1x1x512xf32> to vector<1x512xf32>
    %25 = vector.shape_cast %22 : vector<1x512xf32> to vector<1x1x512xf32>
    tpu.vector_store %arg7[%c0_15, %c0_16, %c0_17], %25 {strides = array<i32>} : memref<1x1x512xf32, #tpu.memory_space<vmem>>, vector<1x1x512xf32>,
    return
  }
  func.func @transform_0(%arg0: i32) -> (i32, i32) {
    %c0_i32 = arith.constant 0 : i32
    %c0_i32_0 = arith.constant 0 : i32
    return %arg0, %c0_i32 : i32, i32
  }
  func.func @transform_1(%arg0: i32) -> (i32, i32) {
    %c0_i32 = arith.constant 0 : i32
    %c0_i32_0 = arith.constant 0 : i32
    %c0_i32_1 = arith.constant 0 : i32
    return %c0_i32, %c0_i32_0 : i32, i32
  }
  func.func @transform_2(%arg0: i32) -> (i32, i32) {
    %c0_i32 = arith.constant 0 : i32
    %c0_i32_0 = arith.constant 0 : i32
    %c0_i32_1 = arith.constant 0 : i32
    return %c0_i32, %c0_i32_0 : i32, i32
  }
  func.func @transform_3(%arg0: i32) -> (i32, i32) {
    %c0_i32 = arith.constant 0 : i32
    %c0_i32_0 = arith.constant 0 : i32
    %c0_i32_1 = arith.constant 0 : i32
    return %c0_i32, %c0_i32_0 : i32, i32
  }
  func.func @transform_4(%arg0: i32) -> (i32, i32) {
    %c0_i32 = arith.constant 0 : i32
    %c0_i32_0 = arith.constant 0 : i32
    return %arg0, %c0_i32 : i32, i32
  }
  func.func @transform_5(%arg0: i32) -> (i32, i32, i32) {
    %c0_i32 = arith.constant 0 : i32
    %c0_i32_0 = arith.constant 0 : i32
    %c0_i32_1 = arith.constant 0 : i32
    return %arg0, %c0_i32, %c0_i32_0 : i32, i32, i32
  }
  func.func @transform_6(%arg0: i32) -> (i32, i32, i32) {
    %c0_i32 = arith.constant 0 : i32
    %c0_i32_0 = arith.constant 0 : i32
    %c0_i32_1 = arith.constant 0 : i32
    return %arg0, %c0_i32, %c0_i32_0 : i32, i32, i32
  }
}

module attributes {stable_mosaic.version = 11 : i64} {
  func.func @_bn_head_kernel(%arg0: i32, %arg1: memref<8x512xbf16, #tpu.memory_space<vmem>>, %arg2: memref<1x512xf32, #tpu.memory_space<vmem>>, %arg3: memref<1x512xf32, #tpu.memory_space<vmem>>, %arg4: memref<8x512xf32, #tpu.memory_space<vmem>>, %arg5: memref<1x1xf32, #tpu.memory_space<vmem>>, %arg6: memref<1x8x8xf32, #tpu.memory_space<vmem>>) attributes {dimension_semantics = [#tpu.dimension_semantics<parallel>], iteration_bounds = array<i64: 1>, scalar_prefetch = 0 : i64, scratch_operands = 0 : i64, tpu.core_type = #tpu.core_type<tc>, window_params = [{transform_indices = @transform_0, window_bounds = array<i64: 8, 512>}, {pipeline_mode = #tpu.pipeline_mode<synchronous>, transform_indices = @transform_1, window_bounds = array<i64: 1, 512>}, {pipeline_mode = #tpu.pipeline_mode<synchronous>, transform_indices = @transform_2, window_bounds = array<i64: 1, 512>}, {pipeline_mode = #tpu.pipeline_mode<synchronous>, transform_indices = @transform_3, window_bounds = array<i64: 8, 512>}, {pipeline_mode = #tpu.pipeline_mode<synchronous>, transform_indices = @transform_4, window_bounds = array<i64: 1, 1>}, {transform_indices = @transform_5, window_bounds = array<i64: 1, 8, 8>}]} {
    %c0 = arith.constant 0 : index
    %c0_0 = arith.constant 0 : index
    %0 = vector.load %arg1[%c0, %c0_0] : memref<8x512xbf16, #tpu.memory_space<vmem>>, vector<8x512xbf16>
    %1 = arith.extf %0 : vector<8x512xbf16> to vector<8x512xf32>
    %c0_1 = arith.constant 0 : index
    %c0_2 = arith.constant 0 : index
    %2 = vector.load %arg2[%c0_1, %c0_2] : memref<1x512xf32, #tpu.memory_space<vmem>>, vector<1x512xf32>
    %3 = vector.broadcast %2 : vector<1x512xf32> to vector<8x512xf32>
    %4 = arith.mulf %1, %3 : vector<8x512xf32>
    %c0_3 = arith.constant 0 : index
    %c0_4 = arith.constant 0 : index
    %5 = vector.load %arg3[%c0_3, %c0_4] : memref<1x512xf32, #tpu.memory_space<vmem>>, vector<1x512xf32>
    %6 = vector.broadcast %5 : vector<1x512xf32> to vector<8x512xf32>
    %7 = arith.addf %4, %6 : vector<8x512xf32>
    %cst = arith.constant 0.000000e+00 : f32
    %8 = vector.broadcast %cst : f32 to vector<8x512xf32>
    %9 = arith.maximumf %7, %8 : vector<8x512xf32>
    %c0_5 = arith.constant 0 : index
    %c0_6 = arith.constant 0 : index
    %10 = vector.load %arg4[%c0_5, %c0_6] : memref<8x512xf32, #tpu.memory_space<vmem>>, vector<8x512xf32>
    "tpu.trace_start"() <{level = 10 : i32, message = "od,nd->on"}> : () -> ()
    %cst_7 = arith.constant dense<0.000000e+00> : vector<8x8xf32>
    %11 = tpu.matmul %10, %9, %cst_7 {dimension_numbers = #tpu.dot_dimension_numbers<[1], [1], [0], [0], [0, 0, 1, 0], [], []>} : vector<8x512xf32>, vector<8x512xf32>, vector<8x8xf32> -> vector<8x8xf32>
    "tpu.trace_stop"() : () -> ()
    %c0_8 = arith.constant 0 : index
    %c0_9 = arith.constant 0 : index
    %12 = vector.load %arg5[%c0_8, %c0_9] : memref<1x1xf32, #tpu.memory_space<vmem>>, vector<1x1xf32>
    %13 = vector.broadcast %12 : vector<1x1xf32> to vector<8x8xf32>
    %14 = arith.addf %11, %13 : vector<8x8xf32>
    %c0_10 = arith.constant 0 : index
    %c0_11 = arith.constant 0 : index
    %c0_12 = arith.constant 0 : index
    %15 = vector.load %arg6[%c0_10, %c0_11, %c0_12] : memref<1x8x8xf32, #tpu.memory_space<vmem>>, vector<1x8x8xf32>
    %16 = vector.shape_cast %15 : vector<1x8x8xf32> to vector<8x8xf32>
    %17 = vector.shape_cast %14 : vector<8x8xf32> to vector<1x8x8xf32>
    tpu.vector_store %arg6[%c0_10, %c0_11, %c0_12], %17 {strides = array<i32>} : memref<1x8x8xf32, #tpu.memory_space<vmem>>, vector<1x8x8xf32>,
    return
  }
  func.func @transform_0(%arg0: i32) -> (i32, i32) {
    %c0_i32 = arith.constant 0 : i32
    %c0_i32_0 = arith.constant 0 : i32
    return %arg0, %c0_i32 : i32, i32
  }
  func.func @transform_1(%arg0: i32) -> (i32, i32) {
    %c0_i32 = arith.constant 0 : i32
    %c0_i32_0 = arith.constant 0 : i32
    %c0_i32_1 = arith.constant 0 : i32
    return %c0_i32, %c0_i32_0 : i32, i32
  }
  func.func @transform_2(%arg0: i32) -> (i32, i32) {
    %c0_i32 = arith.constant 0 : i32
    %c0_i32_0 = arith.constant 0 : i32
    %c0_i32_1 = arith.constant 0 : i32
    return %c0_i32, %c0_i32_0 : i32, i32
  }
  func.func @transform_3(%arg0: i32) -> (i32, i32) {
    %c0_i32 = arith.constant 0 : i32
    %c0_i32_0 = arith.constant 0 : i32
    %c0_i32_1 = arith.constant 0 : i32
    return %c0_i32, %c0_i32_0 : i32, i32
  }
  func.func @transform_4(%arg0: i32) -> (i32, i32) {
    %c0_i32 = arith.constant 0 : i32
    %c0_i32_0 = arith.constant 0 : i32
    %c0_i32_1 = arith.constant 0 : i32
    return %c0_i32, %c0_i32_0 : i32, i32
  }
  func.func @transform_5(%arg0: i32) -> (i32, i32, i32) {
    %c0_i32 = arith.constant 0 : i32
    %c0_i32_0 = arith.constant 0 : i32
    %c0_i32_1 = arith.constant 0 : i32
    return %arg0, %c0_i32, %c0_i32_0 : i32, i32, i32
  }
}

</mosaic_0001>

<llo_original>
// kernel: mine_t_forward.4
$region0: #{mine_t_forward.4}
  #allocation0 [shape = 'u32[]', space=smem, size = 0x4, offset = 0x4, fixed_abs, tag = 'smem constant byte address 0x4 - core index']
  #allocation1 [shape = 'u32[144,128]{1,0:T(1,128)}', space=vmem, size = 0x12000, scoped, tag = 'internal scratch']
  %s0 = inlined_call_operand.vmem [shape: f32[8,32], index: 0, kind: input, shape index: {}]
  %s1 = inlined_call_operand.vmem [shape: bf16[32,512], index: 1, kind: input, shape index: {}]
  %s2 = inlined_call_operand.vmem [shape: bf16[8,512], index: 2, kind: output, shape index: {0}]
  %s3 = inlined_call_operand.vmem [shape: f32[1,1,512], index: 3, kind: output, shape index: {1}]
  %s4 = inlined_call_operand.vmem [shape: f32[1,1,512], index: 4, kind: output, shape index: {2}]
  %5 = xla_tuple %s2, %s3, %s4
  %s6 = sld [smem:[#allocation0]]
  $region34: #{mine_t_forward.4} parent=0
    _
  %s8 = ssub.s32 1, %s6
  %s9 = scalar_select 0, %s8, %s6
  // Predicated region
  $region2: #{mine_t_forward.4} parent=0 // pred_check
    _
  $region3: #{mine_t_forward.4} parent=0 // pred_check_branch
    %11 = sbr.rel (0) target = $region5
  $region4: #{mine_t_forward.4} parent=0 // pred_region
    _
  $region5: #{mine_t_forward.4} parent=0 // pred_fallthru
    _
  // Predicated region
  $region6: #{mine_t_forward.4} parent=0 // pred_check
    _
  $region7: #{mine_t_forward.4} parent=0 // pred_check_branch
    %13 = sbr.rel (0) target = $region9
  $region8: #{mine_t_forward.4} parent=0 // pred_region
    _
  $region9: #{mine_t_forward.4} parent=0 // pred_fallthru
    _
  %v15 = vld [vmem:[%s0] sm:$0xff]
  %v16 = vpack.c.bf16 %v15, %v15
  %v17 = vld [vmem:[%s1] sm:$0xff]
  %v18 = vld [vmem:[%s1 + $0x8] sm:$0xff]
  %v19 = vld [vmem:[%s1 + $0x10] sm:$0xff]
  %v20 = vld [vmem:[%s1 + $0x18] sm:$0xff]
  %v21 = vld [vmem:[%s1 + $0x20] sm:$0xff]
  %v22 = vld [vmem:[%s1 + $0x28] sm:$0xff]
  %v23 = vld [vmem:[%s1 + $0x30] sm:$0xff]
  %v24 = vld [vmem:[%s1 + $0x38] sm:$0xff]
  %v33 = vunpack.c.l.b16 %v17
  %v34 = vunpack.c.h.b16 %v17
  %v35 = vunpack.c.l.b16 %v18
  %v36 = vunpack.c.h.b16 %v18
  %v37 = vunpack.c.l.b16 %v19
  %v38 = vunpack.c.h.b16 %v19
  %v39 = vunpack.c.l.b16 %v20
  %v40 = vunpack.c.h.b16 %v20
  %v41 = vunpack.c.l.b16 %v21
  %v42 = vunpack.c.h.b16 %v21
  %v43 = vunpack.c.l.b16 %v22
  %v44 = vunpack.c.h.b16 %v22
  %v45 = vunpack.c.l.b16 %v23
  %v46 = vunpack.c.h.b16 %v23
  %v47 = vunpack.c.l.b16 %v24
  %v48 = vunpack.c.h.b16 %v24
  %v49 = vpack.c.b16 %v37, %v33
  %v50 = vpack.c.b16 %v38, %v34
  %v51 = vpack.c.b16 %v39, %v35
  %v52 = vpack.c.b16 %v40, %v36
  %v53 = vpack.c.b16 %v45, %v41
  %v54 = vpack.c.b16 %v46, %v42
  %v55 = vpack.c.b16 %v47, %v43
  %v56 = vpack.c.b16 %v48, %v44
  %vm65 = vcmask 261120
  %v67 = vsel %vm65, %v16, 0
  %69 = vmatprep.subr.bf16.mxu0 %v50
  %70 = vmatpush1.bf16.msra.mxu0 %v49
  %71 = vmatprep.subr.bf16.mxu0 %v54
  %72 = vmatpush1.bf16.msra.mxu0 %v53
  %73 = vmatprep.subr.bf16.mxu0 0
  %74 = vmatpush1.bf16.msra.mxu0 0
  %75 = vmatprep.subr.bf16.mxu0 0
  %76 = vmatpush1.bf16.msra.mxu0 0
  %77 = vmatprep.subr.bf16.mxu0 0
  %78 = vmatpush1.bf16.msra.mxu0 0
  %79 = vmatprep.subr.bf16.mxu0 0
  %80 = vmatpush1.bf16.msra.mxu0 0
  %81 = vmatprep.subr.bf16.mxu0 0
  %82 = vmatpush1.bf16.msra.mxu0 0
  %83 = vmatprep.subr.bf16.mxu0 0
  %84 = vmatpush1.bf16.msra.mxu0 0
  %85 = vmatprep.subr.bf16.mxu0 0
  %86 = vmatpush1.bf16.msra.mxu0 0
  %87 = vmatprep.subr.bf16.mxu0 0
  %88 = vmatpush1.bf16.msra.mxu0 0
  %89 = vmatprep.subr.bf16.mxu0 0
  %90 = vmatpush1.bf16.msra.mxu0 0
  %91 = vmatprep.subr.bf16.mxu0 0
  %92 = vmatpush1.bf16.msra.mxu0 0
  %93 = vmatprep.subr.bf16.mxu0 0
  %94 = vmatpush1.bf16.msra.mxu0 0
  %95 = vmatprep.subr.bf16.mxu0 0
  %96 = vmatpush1.bf16.msra.mxu0 0
  %97 = vmatprep.subr.bf16.mxu0 0
  %98 = vmatpush1.bf16.msra.mxu0 0
  %99 = vmatprep.subr.bf16.mxu0 0
  %100 = vmatpush1.bf16.msra.mxu0 0
  %101 = vmatprep.mubr.bf16.mxu0 0
  %102 = vmatmul.mubr.bf16.gmra.mrb[0].mxu0 %v67
  %v103 = vpop.f32.mrb[0].mxu0
  %v104 = vadd.f32 0.0, %v103
  %v105 = vpop.f32.mrb[0].mxu0
  %v106 = vadd.f32 0.0, %v105
  %v107 = vpop.f32.mrb[0].mxu0
  %v108 = vpop.f32.mrb[0].mxu0
  %109 = vdwg.mxu0
  %110 = vmatprep.subr.bf16.mxu0 %v52
  %111 = vmatpush1.bf16.msra.mxu0 %v51
  %112 = vmatprep.subr.bf16.mxu0 %v56
  %113 = vmatpush1.bf16.msra.mxu0 %v55
  %114 = vmatprep.subr.bf16.mxu0 0
  %115 = vmatpush1.bf16.msra.mxu0 0
  %116 = vmatprep.subr.bf16.mxu0 0
  %117 = vmatpush1.bf16.msra.mxu0 0
  %118 = vmatprep.subr.bf16.mxu0 0
  %119 = vmatpush1.bf16.msra.mxu0 0
  %120 = vmatprep.subr.bf16.mxu0 0
  %121 = vmatpush1.bf16.msra.mxu0 0
  %122 = vmatprep.subr.bf16.mxu0 0
  %123 = vmatpush1.bf16.msra.mxu0 0
  %124 = vmatprep.subr.bf16.mxu0 0
  %125 = vmatpush1.bf16.msra.mxu0 0
  %126 = vmatprep.subr.bf16.mxu0 0
  %127 = vmatpush1.bf16.msra.mxu0 0
  %128 = vmatprep.subr.bf16.mxu0 0
  %129 = vmatpush1.bf16.msra.mxu0 0
  %130 = vmatprep.subr.bf16.mxu0 0
  %131 = vmatpush1.bf16.msra.mxu0 0
  %132 = vmatprep.subr.bf16.mxu0 0
  %133 = vmatpush1.bf16.msra.mxu0 0
  %134 = vmatprep.subr.bf16.mxu0 0
  %135 = vmatpush1.bf16.msra.mxu0 0
  %136 = vmatprep.subr.bf16.mxu0 0
  %137 = vmatpush1.bf16.msra.mxu0 0
  %138 = vmatprep.subr.bf16.mxu0 0
  %139 = vmatpush1.bf16.msra.mxu0 0
  %140 = vmatprep.subr.bf16.mxu0 0
  %141 = vmatpush1.bf16.msra.mxu0 0
  %142 = vmatprep.mubr.bf16.mxu0 0
  %143 = vmatmul.mubr.bf16.gmra.mrb[0].mxu0 %v67
  %v144 = vpop.f32.mrb[0].mxu0
  %v145 = vadd.f32 0.0, %v144
  %v146 = vpop.f32.mrb[0].mxu0
  %v147 = vadd.f32 0.0, %v146
  %v148 = vpop.f32.mrb[0].mxu0
  %v149 = vpop.f32.mrb[0].mxu0
  %150 = vdwg.mxu0
  %v151 = vpack.c.bf16 %v104, %v104
  %v152 = vpack.c.bf16 %v106, %v106
  %v153 = vpack.c.bf16 %v145, %v145
  %v154 = vpack.c.bf16 %v147, %v147
  %v159 = vunpack.c.l.b16 %v151
  %v160 = vunpack.c.l.b16 %v152
  %v161 = vunpack.c.l.b16 %v153
  %v162 = vunpack.c.l.b16 %v154
  %v163 = vpack.c.b16 %v160, %v159
  %v164 = vpack.c.b16 %v162, %v161
  %167 = vst [vmem:[%s2] sm:$0xff] %v163
  %168 = vst [vmem:[%s2 + $0x8] sm:$0xff] %v164
  %v169 = vrot.slane %v104, 4
  %v170 = vadd.f32 %v104, %v169
  %v171 = vrot.slane %v170, 2
  %v172 = vadd.f32 %v170, %v171
  %v173 = vrot.slane %v172, 1
  %v174 = vadd.f32 %v172, %v173
  %v175 = vrot.slane %v106, 4
  %v176 = vadd.f32 %v106, %v175
  %v177 = vrot.slane %v176, 2
  %v178 = vadd.f32 %v176, %v177
  %v179 = vrot.slane %v178, 1
  %v180 = vadd.f32 %v178, %v179
  %v181 = vrot.slane %v145, 4
  %v182 = vadd.f32 %v145, %v181
  %v183 = vrot.slane %v182, 2
  %v184 = vadd.f32 %v182, %v183
  %v185 = vrot.slane %v184, 1
  %v186 = vadd.f32 %v184, %v185
  %v187 = vrot.slane %v147, 4
  %v188 = vadd.f32 %v147, %v187
  %v189 = vrot.slane %v188, 2
  %v190 = vadd.f32 %v188, %v189
  %v191 = vrot.slane %v190, 1
  %v192 = vadd.f32 %v190, %v191
  %v197 = vcombine.low %v174, %v180
  %v198 = vcombine.low %v186, %v192
  %v200 = vunpack.c.l.s4 1966171168
  %v201 = vunpack.c.0.s8 %v200
  %v202 = vlaneseq
  %v203 = vshrl.u32 %v202, 7
  %v204 = vsub.s32 %v201, %v203
  %v205 = vrot.slane %v197, %v204
  %v207 = vunpack.c.l.s4 1966171168
  %v208 = vunpack.c.0.s8 %v207
  %v209 = vlaneseq
  %v210 = vshrl.u32 %v209, 7
  %v211 = vsub.s32 %v208, %v210
  %v212 = vrot.slane %v198, %v211
  %v213 = vcombine.low %v205, %v212
  %v215 = vunpack.c.l.s4 1966171168
  %v216 = vunpack.c.0.s8 %v215
  %v217 = vlaneseq
  %v218 = vshrl.u32 %v217, 7
  %v219 = vsub.s32 %v216, %v218
  %v220 = vrot.slane %v213, %v219
  %v222 = vlaneseq
  %vm223 = vcmp.ge.s32.totalorder %v222, 0
  %vm224 = vcmp.lt.s32.totalorder %v222, 512
  %vm225 = vmand %vm223, %vm224
  %226 = vst.msk [vmem:[%s3] sm:$0xf] %vm225, %v220
  %v227 = vmul.f32 %v104, %v104
  %v228 = vmul.f32 %v106, %v106
  %v229 = vmul.f32 %v145, %v145
  %v230 = vmul.f32 %v147, %v147
  %v231 = vrot.slane %v227, 4
  %v232 = vadd.f32 %v227, %v231
  %v233 = vrot.slane %v232, 2
  %v234 = vadd.f32 %v232, %v233
  %v235 = vrot.slane %v234, 1
  %v236 = vadd.f32 %v234, %v235
  %v237 = vrot.slane %v228, 4
  %v238 = vadd.f32 %v228, %v237
  %v239 = vrot.slane %v238, 2
  %v240 = vadd.f32 %v238, %v239
  %v241 = vrot.slane %v240, 1
  %v242 = vadd.f32 %v240, %v241
  %v243 = vrot.slane %v229, 4
  %v244 = vadd.f32 %v229, %v243
  %v245 = vrot.slane %v244, 2
  %v246 = vadd.f32 %v244, %v245
  %v247 = vrot.slane %v246, 1
  %v248 = vadd.f32 %v246, %v247
  %v249 = vrot.slane %v230, 4
  %v250 = vadd.f32 %v230, %v249
  %v251 = vrot.slane %v250, 2
  %v252 = vadd.f32 %v250, %v251
  %v253 = vrot.slane %v252, 1
  %v254 = vadd.f32 %v252, %v253
  %v259 = vcombine.low %v236, %v242
  %v260 = vcombine.low %v248, %v254
  %v262 = vunpack.c.l.s4 1966171168
  %v263 = vunpack.c.0.s8 %v262
  %v264 = vlaneseq
  %v265 = vshrl.u32 %v264, 7
  %v266 = vsub.s32 %v263, %v265
  %v267 = vrot.slane %v259, %v266
  %v269 = vunpack.c.l.s4 1966171168
  %v270 = vunpack.c.0.s8 %v269
  %v271 = vlaneseq
  %v272 = vshrl.u32 %v271, 7
  %v273 = vsub.s32 %v270, %v272
  %v274 = vrot.slane %v260, %v273
  %v275 = vcombine.low %v267, %v274
  %v277 = vunpack.c.l.s4 1966171168
  %v278 = vunpack.c.0.s8 %v277
  %v279 = vlaneseq
  %v280 = vshrl.u32 %v279, 7
  %v281 = vsub.s32 %v278, %v280
  %v282 = vrot.slane %v275, %v281
  %284 = vst.msk [vmem:[%s4] sm:$0xf] %vm225, %v282
  // Predicated region
  $region10: #{mine_t_forward.4} parent=0 // pred_check
    _
  $region11: #{mine_t_forward.4} parent=0 // pred_check_branch
    %286 = sbr.rel (0) target = $region13
  $region12: #{mine_t_forward.4} parent=0 // pred_region
    _
  $region13: #{mine_t_forward.4} parent=0 // pred_fallthru
    _
  // Predicated region
  $region14: #{mine_t_forward.4} parent=0 // pred_check
    _
  $region15: #{mine_t_forward.4} parent=0 // pred_check_branch
    %288 = sbr.rel (0) target = $region17
  $region16: #{mine_t_forward.4} parent=0 // pred_region
    _
  $region17: #{mine_t_forward.4} parent=0 // pred_fallthru
    _
  // Predicated region
  $region18: #{mine_t_forward.4} parent=0 // pred_check
    _
  $region19: #{mine_t_forward.4} parent=0 // pred_check_branch
    %290 = sbr.rel (0) target = $region21
  $region20: #{mine_t_forward.4} parent=0 // pred_region
    _
  $region21: #{mine_t_forward.4} parent=0 // pred_fallthru
    _
  // Predicated region
  $region22: #{mine_t_forward.4} parent=0 // pred_check
    _
  $region23: #{mine_t_forward.4} parent=0 // pred_check_branch
    %292 = sbr.rel (0) target = $region25
  $region24: #{mine_t_forward.4} parent=0 // pred_region
    _
  $region25: #{mine_t_forward.4} parent=0 // pred_fallthru
    _
  // Predicated region
  $region26: #{mine_t_forward.4} parent=0 // pred_check
    _
  $region27: #{mine_t_forward.4} parent=0 // pred_check_branch
    %294 = sbr.rel (0) target = $region29
  $region28: #{mine_t_forward.4} parent=0 // pred_region
    _
  $region29: #{mine_t_forward.4} parent=0 // pred_fallthru
    _
  // Predicated region
  $region30: #{mine_t_forward.4} parent=0 // pred_check
    _
  $region31: #{mine_t_forward.4} parent=0 // pred_check_branch
    %296 = sbr.rel (0) target = $region33
  $region32: #{mine_t_forward.4} parent=0 // pred_region
    _
  $region33: #{mine_t_forward.4} parent=0 // pred_fallthru
    _

// kernel: mine_t_forward.5
$region0: #{mine_t_forward.5}
  #allocation0 [shape = 'u32[]', space=smem, size = 0x4, offset = 0x4, fixed_abs, tag = 'smem constant byte address 0x4 - core index']
  #allocation1 [shape = 'u32[144,128]{1,0:T(1,128)}', space=vmem, size = 0x12000, scoped, tag = 'internal scratch']
  %s0 = inlined_call_operand.vmem [shape: bf16[8,512], index: 0, kind: input, shape index: {}]
  %s1 = inlined_call_operand.vmem [shape: f32[1,512], index: 1, kind: input, shape index: {}]
  %s2 = inlined_call_operand.vmem [shape: f32[1,512], index: 2, kind: input, shape index: {}]
  %s3 = inlined_call_operand.vmem [shape: bf16[512,512], index: 3, kind: input, shape index: {}]
  %s4 = inlined_call_operand.vmem [shape: bf16[8,512], index: 4, kind: output, shape index: {0}]
  %s5 = inlined_call_operand.vmem [shape: f32[1,1,512], index: 5, kind: output, shape index: {1}]
  %s6 = inlined_call_operand.vmem [shape: f32[1,1,512], index: 6, kind: output, shape index: {2}]
  %7 = xla_tuple %s4, %s5, %s6
  %s8 = sld [smem:[#allocation0]]
  $region42: #{mine_t_forward.5} parent=0
    _
  %s10 = ssub.s32 1, %s8
  %s11 = scalar_select 0, %s10, %s8
  // Predicated region
  $region2: #{mine_t_forward.5} parent=0 // pred_check
    _
  $region3: #{mine_t_forward.5} parent=0 // pred_check_branch
    %13 = sbr.rel (0) target = $region5
  $region4: #{mine_t_forward.5} parent=0 // pred_region
    _
  $region5: #{mine_t_forward.5} parent=0 // pred_fallthru
    _
  // Predicated region
  $region6: #{mine_t_forward.5} parent=0 // pred_check
    _
  $region7: #{mine_t_forward.5} parent=0 // pred_check_branch
    %15 = sbr.rel (0) target = $region9
  $region8: #{mine_t_forward.5} parent=0 // pred_region
    _
  $region9: #{mine_t_forward.5} parent=0 // pred_fallthru
    _
  // Predicated region
  $region10: #{mine_t_forward.5} parent=0 // pred_check
    _
  $region11: #{mine_t_forward.5} parent=0 // pred_check_branch
    %17 = sbr.rel (0) target = $region13
  $region12: #{mine_t_forward.5} parent=0 // pred_region
    _
  $region13: #{mine_t_forward.5} parent=0 // pred_fallthru
    _
  // Predicated region
  $region14: #{mine_t_forward.5} parent=0 // pred_check
    _
  $region15: #{mine_t_forward.5} parent=0 // pred_check_branch
    %19 = sbr.rel (0) target = $region17
  $region16: #{mine_t_forward.5} parent=0 // pred_region
    _
  $region17: #{mine_t_forward.5} parent=0 // pred_fallthru
    _
  %v20 = vld [vmem:[%s0] sm:$0xff]
  %v21 = vld [vmem:[%s0 + $0x8] sm:$0xff]
  %v22 = vunpack.c.l.bf16 %v20
  %v23 = vunpack.c.h.bf16 %v20
  %v24 = vunpack.c.l.bf16 %v21
  %v25 = vunpack.c.h.bf16 %v21
  %v26 = vld [vmem:[%s1] sm:$0xf]
  %v28 = vlaneseq
  %v29 = vshrl.u32 %v28, 7
  %v30 = vsub.s32 0, %v29
  %v31 = vrot.slane %v26, %v30
  %v32 = vlaneseq
  %v33 = vshrl.u32 %v32, 7
  %v34 = vsub.s32 1, %v33
  %v35 = vrot.slane %v26, %v34
  %v36 = vlaneseq
  %v37 = vshrl.u32 %v36, 7
  %v38 = vsub.s32 2, %v37
  %v39 = vrot.slane %v26, %v38
  %v40 = vlaneseq
  %v41 = vshrl.u32 %v40, 7
  %v42 = vsub.s32 3, %v41
  %v43 = vrot.slane %v26, %v42
  %v48 = vmul.f32 %v22, %v31
  %v49 = vmul.f32 %v23, %v35
  %v50 = vmul.f32 %v24, %v39
  %v51 = vmul.f32 %v25, %v43
  %v52 = vld [vmem:[%s2] sm:$0xf]
  %v54 = vlaneseq
  %v55 = vshrl.u32 %v54, 7
  %v56 = vsub.s32 0, %v55
  %v57 = vrot.slane %v52, %v56
  %v58 = vlaneseq
  %v59 = vshrl.u32 %v58, 7
  %v60 = vsub.s32 1, %v59
  %v61 = vrot.slane %v52, %v60
  %v62 = vlaneseq
  %v63 = vshrl.u32 %v62, 7
  %v64 = vsub.s32 2, %v63
  %v65 = vrot.slane %v52, %v64
  %v66 = vlaneseq
  %v67 = vshrl.u32 %v66, 7
  %v68 = vsub.s32 3, %v67
  %v69 = vrot.slane %v52, %v68
  %v74 = vadd.f32 %v48, %v57
  %v75 = vadd.f32 %v49, %v61
  %v76 = vadd.f32 %v50, %v65
  %v77 = vadd.f32 %v51, %v69
  %v78 = vmax.f32 %v74, 0.0
  %v79 = vmax.f32 %v75, 0.0
  %v80 = vmax.f32 %v76, 0.0
  %v81 = vmax.f32 %v77, 0.0
  %v82 = vpack.c.bf16 %v78, %v78
  %v83 = vpack.c.bf16 %v79, %v79
  %v84 = vpack.c.bf16 %v80, %v80
  %v85 = vpack.c.bf16 %v81, %v81
  %v86 = vld [vmem:[%s3] sm:$0xff]
  %v87 = vld [vmem:[%s3 + $0x8] sm:$0xff]
  %v88 = vld [vmem:[%s3 + $0x10] sm:$0xff]
  %v89 = vld [vmem:[%s3 + $0x18] sm:$0xff]
  %v90 = vld [vmem:[%s3 + $0x20] sm:$0xff]
  %v91 = vld [vmem:[%s3 + $0x28] sm:$0xff]
  %v92 = vld [vmem:[%s3 + $0x30] sm:$0xff]
  %v93 = vld [vmem:[%s3 + $0x38] sm:$0xff]
  %v94 = vld [vmem:[%s3 + $0x40] sm:$0xff]
  %v95 = vld [vmem:[%s3 + $0x48] sm:$0xff]
  %v96 = vld [vmem:[%s3 + $0x50] sm:$0xff]
  %v97 = vld [vmem:[%s3 + $0x58] sm:$0xff]
  %v98 = vld [vmem:[%s3 + $0x60] sm:$0xff]
  %v99 = vld [vmem:[%s3 + $0x68] sm:$0xff]
  %v100 = vld [vmem:[%s3 + $0x70] sm:$0xff]
  %v101 = vld [vmem:[%s3 + $0x78] sm:$0xff]
  %v102 = vld [vmem:[%s3 + $0x80] sm:$0xff]
  %v103 = vld [vmem:[%s3 + $0x88] sm:$0xff]
  %v104 = vld [vmem:[%s3 + $0x90] sm:$0xff]
  %v105 = vld [vmem:[%s3 + $0x98] sm:$0xff]
  %v106 = vld [vmem:[%s3 + $0xa0] sm:$0xff]
  %v107 = vld [vmem:[%s3 + $0xa8] sm:$0xff]
  %v108 = vld [vmem:[%s3 + $0xb0] sm:$0xff]
  %v109 = vld [vmem:[%s3 + $0xb8] sm:$0xff]
  %v110 = vld [vmem:[%s3 + $0xc0] sm:$0xff]
  %v111 = vld [vmem:[%s3 + $0xc8] sm:$0xff]
  %v112 = vld [vmem:[%s3 + $0xd0] sm:$0xff]
  %v113 = vld [vmem:[%s3 + $0xd8] sm:$0xff]
  %v114 = vld [vmem:[%s3 + $0xe0] sm:$0xff]
  %v115 = vld [vmem:[%s3 + $0xe8] sm:$0xff]
  %v116 = vld [vmem:[%s3 + $0xf0] sm:$0xff]
  %v117 = vld [vmem:[%s3 + $0xf8] sm:$0xff]
  %v118 = vld [vmem:[%s3 + $0x100] sm:$0xff]
  %v119 = vld [vmem:[%s3 + $0x108] sm:$0xff]
  %v120 = vld [vmem:[%s3 + $0x110] sm:$0xff]
  %v121 = vld [vmem:[%s3 + $0x118] sm:$0xff]
  %v122 = vld [vmem:[%s3 + $0x120] sm:$0xff]
  %v123 = vld [vmem:[%s3 + $0x128] sm:$0xff]
  %v124 = vld [vmem:[%s3 + $0x130] sm:$0xff]
  %v125 = vld [vmem:[%s3 + $0x138] sm:$0xff]
  %v126 = vld [vmem:[%s3 + $0x140] sm:$0xff]
  %v127 = vld [vmem:[%s3 + $0x148] sm:$0xff]
  %v128 = vld [vmem:[%s3 + $0x150] sm:$0xff]
  %v129 = vld [vmem:[%s3 + $0x158] sm:$0xff]
  %v130 = vld [vmem:[%s3 + $0x160] sm:$0xff]
  %v131 = vld [vmem:[%s3 + $0x168] sm:$0xff]
  %v132 = vld [vmem:[%s3 + $0x170] sm:$0xff]
  %v133 = vld [vmem:[%s3 + $0x178] sm:$0xff]
  %v134 = vld [vmem:[%s3 + $0x180] sm:$0xff]
  %v135 = vld [vmem:[%s3 + $0x188] sm:$0xff]
  %v136 = vld [vmem:[%s3 + $0x190] sm:$0xff]
  %v137 = vld [vmem:[%s3 + $0x198] sm:$0xff]
  %v138 = vld [vmem:[%s3 + $0x1a0] sm:$0xff]
  %v139 = vld [vmem:[%s3 + $0x1a8] sm:$0xff]
  %v140 = vld [vmem:[%s3 + $0x1b0] sm:$0xff]
  %v141 = vld [vmem:[%s3 + $0x1b8] sm:$0xff]
  %v142 = vld [vmem:[%s3 + $0x1c0] sm:$0xff]
  %v143 = vld [vmem:[%s3 + $0x1c8] sm:$0xff]
  %v144 = vld [vmem:[%s3 + $0x1d0] sm:$0xff]
  %v145 = vld [vmem:[%s3 + $0x1d8] sm:$0xff]
  %v146 = vld [vmem:[%s3 + $0x1e0] sm:$0xff]
  %v147 = vld [vmem:[%s3 + $0x1e8] sm:$0xff]
  %v148 = vld [vmem:[%s3 + $0x1f0] sm:$0xff]
  %v149 = vld [vmem:[%s3 + $0x1f8] sm:$0xff]
  %v150 = vld [vmem:[%s3 + $0x200] sm:$0xff]
  %v151 = vld [vmem:[%s3 + $0x208] sm:$0xff]
  %v152 = vld [vmem:[%s3 + $0x210] sm:$0xff]
  %v153 = vld [vmem:[%s3 + $0x218] sm:$0xff]
  %v154 = vld [vmem:[%s3 + $0x220] sm:$0xff]
  %v155 = vld [vmem:[%s3 + $0x228] sm:$0xff]
  %v156 = vld [vmem:[%s3 + $0x230] sm:$0xff]
  %v157 = vld [vmem:[%s3 + $0x238] sm:$0xff]
  %v158 = vld [vmem:[%s3 + $0x240] sm:$0xff]
  %v159 = vld [vmem:[%s3 + $0x248] sm:$0xff]
  %v160 = vld [vmem:[%s3 + $0x250] sm:$0xff]
  %v161 = vld [vmem:[%s3 + $0x258] sm:$0xff]
  %v162 = vld [vmem:[%s3 + $0x260] sm:$0xff]
  %v163 = vld [vmem:[%s3 + $0x268] sm:$0xff]
  %v164 = vld [vmem:[%s3 + $0x270] sm:$0xff]
  %v165 = vld [vmem:[%s3 + $0x278] sm:$0xff]
  %v166 = vld [vmem:[%s3 + $0x280] sm:$0xff]
  %v167 = vld [vmem:[%s3 + $0x288] sm:$0xff]
  %v168 = vld [vmem:[%s3 + $0x290] sm:$0xff]
  %v169 = vld [vmem:[%s3 + $0x298] sm:$0xff]
  %v170 = vld [vmem:[%s3 + $0x2a0] sm:$0xff]
  %v171 = vld [vmem:[%s3 + $0x2a8] sm:$0xff]
  %v172 = vld [vmem:[%s3 + $0x2b0] sm:$0xff]
  %v173 = vld [vmem:[%s3 + $0x2b8] sm:$0xff]
  %v174 = vld [vmem:[%s3 + $0x2c0] sm:$0xff]
  %v175 = vld [vmem:[%s3 + $0x2c8] sm:$0xff]
  %v176 = vld [vmem:[%s3 + $0x2d0] sm:$0xff]
  %v177 = vld [vmem:[%s3 + $0x2d8] sm:$0xff]
  %v178 = vld [vmem:[%s3 + $0x2e0] sm:$0xff]
  %v179 = vld [vmem:[%s3 + $0x2e8] sm:$0xff]
  %v180 = vld [vmem:[%s3 + $0x2f0] sm:$0xff]
  %v181 = vld [vmem:[%s3 + $0x2f8] sm:$0xff]
  %v182 = vld [vmem:[%s3 + $0x300] sm:$0xff]
  %v183 = vld [vmem:[%s3 + $0x308] sm:$0xff]
  %v184 = vld [vmem:[%s3 + $0x310] sm:$0xff]
  %v185 = vld [vmem:[%s3 + $0x318] sm:$0xff]
  %v186 = vld [vmem:[%s3 + $0x320] sm:$0xff]
  %v187 = vld [vmem:[%s3 + $0x328] sm:$0xff]
  %v188 = vld [vmem:[%s3 + $0x330] sm:$0xff]
  %v189 = vld [vmem:[%s3 + $0x338] sm:$0xff]
  %v190 = vld [vmem:[%s3 + $0x340] sm:$0xff]
  %v191 = vld [vmem:[%s3 + $0x348] sm:$0xff]
  %v192 = vld [vmem:[%s3 + $0x350] sm:$0xff]
  %v193 = vld [vmem:[%s3 + $0x358] sm:$0xff]
  %v194 = vld [vmem:[%s3 + $0x360] sm:$0xff]
  %v195 = vld [vmem:[%s3 + $0x368] sm:$0xff]
  %v196 = vld [vmem:[%s3 + $0x370] sm:$0xff]
  %v197 = vld [vmem:[%s3 + $0x378] sm:$0xff]
  %v198 = vld [vmem:[%s3 + $0x380] sm:$0xff]
  %v199 = vld [vmem:[%s3 + $0x388] sm:$0xff]
  %v200 = vld [vmem:[%s3 + $0x390] sm:$0xff]
  %v201 = vld [vmem:[%s3 + $0x398] sm:$0xff]
  %v202 = vld [vmem:[%s3 + $0x3a0] sm:$0xff]
  %v203 = vld [vmem:[%s3 + $0x3a8] sm:$0xff]
  %v204 = vld [vmem:[%s3 + $0x3b0] sm:$0xff]
  %v205 = vld [vmem:[%s3 + $0x3b8] sm:$0xff]
  %v206 = vld [vmem:[%s3 + $0x3c0] sm:$0xff]
  %v207 = vld [vmem:[%s3 + $0x3c8] sm:$0xff]
  %v208 = vld [vmem:[%s3 + $0x3d0] sm:$0xff]
  %v209 = vld [vmem:[%s3 + $0x3d8] sm:$0xff]
  %v210 = vld [vmem:[%s3 + $0x3e0] sm:$0xff]
  %v211 = vld [vmem:[%s3 + $0x3e8] sm:$0xff]
  %v212 = vld [vmem:[%s3 + $0x3f0] sm:$0xff]
  %v213 = vld [vmem:[%s3 + $0x3f8] sm:$0xff]
  %v342 = vunpack.c.l.b16 %v86
  %v343 = vunpack.c.h.b16 %v86
  %v344 = vunpack.c.l.b16 %v87
  %v345 = vunpack.c.h.b16 %v87
  %v346 = vunpack.c.l.b16 %v88
  %v347 = vunpack.c.h.b16 %v88
  %v348 = vunpack.c.l.b16 %v89
  %v349 = vunpack.c.h.b16 %v89
  %v350 = vunpack.c.l.b16 %v90
  %v351 = vunpack.c.h.b16 %v90
  %v352 = vunpack.c.l.b16 %v91
  %v353 = vunpack.c.h.b16 %v91
  %v354 = vunpack.c.l.b16 %v92
  %v355 = vunpack.c.h.b16 %v92
  %v356 = vunpack.c.l.b16 %v93
  %v357 = vunpack.c.h.b16 %v93
  %v358 = vunpack.c.l.b16 %v94
  %v359 = vunpack.c.h.b16 %v94
  %v360 = vunpack.c.l.b16 %v95
  %v361 = vunpack.c.h.b16 %v95
  %v362 = vunpack.c.l.b16 %v96
  %v363 = vunpack.c.h.b16 %v96
  %v364 = vunpack.c.l.b16 %v97
  %v365 = vunpack.c.h.b16 %v97
  %v366 = vunpack.c.l.b16 %v98
  %v367 = vunpack.c.h.b16 %v98
  %v368 = vunpack.c.l.b16 %v99
  %v369 = vunpack.c.h.b16 %v99
  %v370 = vunpack.c.l.b16 %v100
  %v371 = vunpack.c.h.b16 %v100
  %v372 = vunpack.c.l.b16 %v101
  %v373 = vunpack.c.h.b16 %v101
  %v374 = vunpack.c.l.b16 %v102
  %v375 = vunpack.c.h.b16 %v102
  %v376 = vunpack.c.l.b16 %v103
  %v377 = vunpack.c.h.b16 %v103
  %v378 = vunpack.c.l.b16 %v104
  %v379 = vunpack.c.h.b16 %v104
  %v380 = vunpack.c.l.b16 %v105
  %v381 = vunpack.c.h.b16 %v105
  %v382 = vunpack.c.l.b16 %v106
  %v383 = vunpack.c.h.b16 %v106
  %v384 = vunpack.c.l.b16 %v107
  %v385 = vunpack.c.h.b16 %v107
  %v386 = vunpack.c.l.b16 %v108
  %v387 = vunpack.c.h.b16 %v108
  %v388 = vunpack.c.l.b16 %v109
  %v389 = vunpack.c.h.b16 %v109
  %v390 = vunpack.c.l.b16 %v110
  %v391 = vunpack.c.h.b16 %v110
  %v392 = vunpack.c.l.b16 %v111
  %v393 = vunpack.c.h.b16 %v111
  %v394 = vunpack.c.l.b16 %v112
  %v395 = vunpack.c.h.b16 %v112
  %v396 = vunpack.c.l.b16 %v113
  %v397 = vunpack.c.h.b16 %v113
  %v398 = vunpack.c.l.b16 %v114
  %v399 = vunpack.c.h.b16 %v114
  %v400 = vunpack.c.l.b16 %v115
  %v401 = vunpack.c.h.b16 %v115
  %v402 = vunpack.c.l.b16 %v116
  %v403 = vunpack.c.h.b16 %v116
  %v404 = vunpack.c.l.b16 %v117
  %v405 = vunpack.c.h.b16 %v117
  %v406 = vunpack.c.l.b16 %v118
  %v407 = vunpack.c.h.b16 %v118
  %v408 = vunpack.c.l.b16 %v119
  %v409 = vunpack.c.h.b16 %v119
  %v410 = vunpack.c.l.b16 %v120
  %v411 = vunpack.c.h.b16 %v120
  %v412 = vunpack.c.l.b16 %v121
  %v413 = vunpack.c.h.b16 %v121
  %v414 = vunpack.c.l.b16 %v122
  %v415 = vunpack.c.h.b16 %v122
  %v416 = vunpack.c.l.b16 %v123
  %v417 = vunpack.c.h.b16 %v123
  %v418 = vunpack.c.l.b16 %v124
  %v419 = vunpack.c.h.b16 %v124
  %v420 = vunpack.c.l.b16 %v125
  %v421 = vunpack.c.h.b16 %v125
  %v422 = vunpack.c.l.b16 %v126
  %v423 = vunpack.c.h.b16 %v126
  %v424 = vunpack.c.l.b16 %v127
  %v425 = vunpack.c.h.b16 %v127
  %v426 = vunpack.c.l.b16 %v128
  %v427 = vunpack.c.h.b16 %v128
  %v428 = vunpack.c.l.b16 %v129
  %v429 = vunpack.c.h.b16 %v129
  %v430 = vunpack.c.l.b16 %v130
  %v431 = vunpack.c.h.b16 %v130
  %v432 = vunpack.c.l.b16 %v131
  %v433 = vunpack.c.h.b16 %v131
  %v434 = vunpack.c.l.b16 %v132
  %v435 = vunpack.c.h.b16 %v132
  %v436 = vunpack.c.l.b16 %v133
  %v437 = vunpack.c.h.b16 %v133
  %v438 = vunpack.c.l.b16 %v134
  %v439 = vunpack.c.h.b16 %v134
  %v440 = vunpack.c.l.b16 %v135
  %v441 = vunpack.c.h.b16 %v135
  %v442 = vunpack.c.l.b16 %v136
  %v443 = vunpack.c.h.b16 %v136
  %v444 = vunpack.c.l.b16 %v137
  %v445 = vunpack.c.h.b16 %v137
  %v446 = vunpack.c.l.b16 %v138
  %v447 = vunpack.c.h.b16 %v138
  %v448 = vunpack.c.l.b16 %v139
  %v449 = vunpack.c.h.b16 %v139
  %v450 = vunpack.c.l.b16 %v140
  %v451 = vunpack.c.h.b16 %v140
  %v452 = vunpack.c.l.b16 %v141
  %v453 = vunpack.c.h.b16 %v141
  %v454 = vunpack.c.l.b16 %v142
  %v455 = vunpack.c.h.b16 %v142
  %v456 = vunpack.c.l.b16 %v143
  %v457 = vunpack.c.h.b16 %v143
  %v458 = vunpack.c.l.b16 %v144
  %v459 = vunpack.c.h.b16 %v144
  %v460 = vunpack.c.l.b16 %v145
  %v461 = vunpack.c.h.b16 %v145
  %v462 = vunpack.c.l.b16 %v146
  %v463 = vunpack.c.h.b16 %v146
  %v464 = vunpack.c.l.b16 %v147
  %v465 = vunpack.c.h.b16 %v147
  %v466 = vunpack.c.l.b16 %v148
  %v467 = vunpack.c.h.b16 %v148
  %v468 = vunpack.c.l.b16 %v149
  %v469 = vunpack.c.h.b16 %v149
  %v470 = vunpack.c.l.b16 %v150
  %v471 = vunpack.c.h.b16 %v150
  %v472 = vunpack.c.l.b16 %v151
  %v473 = vunpack.c.h.b16 %v151
  %v474 = vunpack.c.l.b16 %v152
  %v475 = vunpack.c.h.b16 %v152
  %v476 = vunpack.c.l.b16 %v153
  %v477 = vunpack.c.h.b16 %v153
  %v478 = vunpack.c.l.b16 %v154
  %v479 = vunpack.c.h.b16 %v154
  %v480 = vunpack.c.l.b16 %v155
  %v481 = vunpack.c.h.b16 %v155
  %v482 = vunpack.c.l.b16 %v156
  %v483 = vunpack.c.h.b16 %v156
  %v484 = vunpack.c.l.b16 %v157
  %v485 = vunpack.c.h.b16 %v157
  %v486 = vunpack.c.l.b16 %v158
  %v487 = vunpack.c.h.b16 %v158
  %v488 = vunpack.c.l.b16 %v159
  %v489 = vunpack.c.h.b16 %v159
  %v490 = vunpack.c.l.b16 %v160
  %v491 = vunpack.c.h.b16 %v160
  %v492 = vunpack.c.l.b16 %v161
  %v493 = vunpack.c.h.b16 %v161
  %v494 = vunpack.c.l.b16 %v162
  %v495 = vunpack.c.h.b16 %v162
  %v496 = vunpack.c.l.b16 %v163
  %v497 = vunpack.c.h.b16 %v163
  %v498 = vunpack.c.l.b16 %v164
  %v499 = vunpack.c.h.b16 %v164
  %v500 = vunpack.c.l.b16 %v165
  %v501 = vunpack.c.h.b16 %v165
  %v502 = vunpack.c.l.b16 %v166
  %v503 = vunpack.c.h.b16 %v166
  %v504 = vunpack.c.l.b16 %v167
  %v505 = vunpack.c.h.b16 %v167
  %v506 = vunpack.c.l.b16 %v168
  %v507 = vunpack.c.h.b16 %v168
  %v508 = vunpack.c.l.b16 %v169
  %v509 = vunpack.c.h.b16 %v169
  %v510 = vunpack.c.l.b16 %v170
  %v511 = vunpack.c.h.b16 %v170
  %v512 = vunpack.c.l.b16 %v171
  %v513 = vunpack.c.h.b16 %v171
  %v514 = vunpack.c.l.b16 %v172
  %v515 = vunpack.c.h.b16 %v172
  %v516 = vunpack.c.l.b16 %v173
  %v517 = vunpack.c.h.b16 %v173
  %v518 = vunpack.c.l.b16 %v174
  %v519 = vunpack.c.h.b16 %v174
  %v520 = vunpack.c.l.b16 %v175
  %v521 = vunpack.c.h.b16 %v175
  %v522 = vunpack.c.l.b16 %v176
  %v523 = vunpack.c.h.b16 %v176
  %v524 = vunpack.c.l.b16 %v177
  %v525 = vunpack.c.h.b16 %v177
  %v526 = vunpack.c.l.b16 %v178
  %v527 = vunpack.c.h.b16 %v178
  %v528 = vunpack.c.l.b16 %v179
  %v529 = vunpack.c.h.b16 %v179
  %v530 = vunpack.c.l.b16 %v180
  %v531 = vunpack.c.h.b16 %v180
  %v532 = vunpack.c.l.b16 %v181
  %v533 = vunpack.c.h.b16 %v181
  %v534 = vunpack.c.l.b16 %v182
  %v535 = vunpack.c.h.b16 %v182
  %v536 = vunpack.c.l.b16 %v183
  %v537 = vunpack.c.h.b16 %v183
  %v538 = vunpack.c.l.b16 %v184
  %v539 = vunpack.c.h.b16 %v184
  %v540 = vunpack.c.l.b16 %v185
  %v541 = vunpack.c.h.b16 %v185
  %v542 = vunpack.c.l.b16 %v186
  %v543 = vunpack.c.h.b16 %v186
  %v544 = vunpack.c.l.b16 %v187
  %v545 = vunpack.c.h.b16 %v187
  %v546 = vunpack.c.l.b16 %v188
  %v547 = vunpack.c.h.b16 %v188
  %v548 = vunpack.c.l.b16 %v189
  %v549 = vunpack.c.h.b16 %v189
  %v550 = vunpack.c.l.b16 %v190
  %v551 = vunpack.c.h.b16 %v190
  %v552 = vunpack.c.l.b16 %v191
  %v553 = vunpack.c.h.b16 %v191
  %v554 = vunpack.c.l.b16 %v192
  %v555 = vunpack.c.h.b16 %v192
  %v556 = vunpack.c.l.b16 %v193
  %v557 = vunpack.c.h.b16 %v193
  %v558 = vunpack.c.l.b16 %v194
  %v559 = vunpack.c.h.b16 %v194
  %v560 = vunpack.c.l.b16 %v195
  %v561 = vunpack.c.h.b16 %v195
  %v562 = vunpack.c.l.b16 %v196
  %v563 = vunpack.c.h.b16 %v196
  %v564 = vunpack.c.l.b16 %v197
  %v565 = vunpack.c.h.b16 %v197
  %v566 = vunpack.c.l.b16 %v198
  %v567 = vunpack.c.h.b16 %v198
  %v568 = vunpack.c.l.b16 %v199
  %v569 = vunpack.c.h.b16 %v199
  %v570 = vunpack.c.l.b16 %v200
  %v571 = vunpack.c.h.b16 %v200
  %v572 = vunpack.c.l.b16 %v201
  %v573 = vunpack.c.h.b16 %v201
  %v574 = vunpack.c.l.b16 %v202
  %v575 = vunpack.c.h.b16 %v202
  %v576 = vunpack.c.l.b16 %v203
  %v577 = vunpack.c.h.b16 %v203
  %v578 = vunpack.c.l.b16 %v204
  %v579 = vunpack.c.h.b16 %v204
  %v580 = vunpack.c.l.b16 %v205
  %v581 = vunpack.c.h.b16 %v205
  %v582 = vunpack.c.l.b16 %v206
  %v583 = vunpack.c.h.b16 %v206
  %v584 = vunpack.c.l.b16 %v207
  %v585 = vunpack.c.h.b16 %v207
  %v586 = vunpack.c.l.b16 %v208
  %v587 = vunpack.c.h.b16 %v208
  %v588 = vunpack.c.l.b16 %v209
  %v589 = vunpack.c.h.b16 %v209
  %v590 = vunpack.c.l.b16 %v210
  %v591 = vunpack.c.h.b16 %v210
  %v592 = vunpack.c.l.b16 %v211
  %v593 = vunpack.c.h.b16 %v211
  %v594 = vunpack.c.l.b16 %v212
  %v595 = vunpack.c.h.b16 %v212
  %v596 = vunpack.c.l.b16 %v213
  %v597 = vunpack.c.h.b16 %v213
  %v598 = vpack.c.b16 %v346, %v342
  %v599 = vpack.c.b16 %v347, %v343
  %v600 = vpack.c.b16 %v348, %v344
  %v601 = vpack.c.b16 %v349, %v345
  %v602 = vpack.c.b16 %v354, %v350
  %v603 = vpack.c.b16 %v355, %v351
  %v604 = vpack.c.b16 %v356, %v352
  %v605 = vpack.c.b16 %v357, %v353
  %v606 = vpack.c.b16 %v362, %v358
  %v607 = vpack.c.b16 %v363, %v359
  %v608 = vpack.c.b16 %v364, %v360
  %v609 = vpack.c.b16 %v365, %v361
  %v610 = vpack.c.b16 %v370, %v366
  %v611 = vpack.c.b16 %v371, %v367
  %v612 = vpack.c.b16 %v372, %v368
  %v613 = vpack.c.b16 %v373, %v369
  %v614 = vpack.c.b16 %v378, %v374
  %v615 = vpack.c.b16 %v379, %v375
  %v616 = vpack.c.b16 %v380, %v376
  %v617 = vpack.c.b16 %v381, %v377
  %v618 = vpack.c.b16 %v386, %v382
  %v619 = vpack.c.b16 %v387, %v383
  %v620 = vpack.c.b16 %v388, %v384
  %v621 = vpack.c.b16 %v389, %v385
  %v622 = vpack.c.b16 %v394, %v390
  %v623 = vpack.c.b16 %v395, %v391
  %v624 = vpack.c.b16 %v396, %v392
  %v625 = vpack.c.b16 %v397, %v393
  %v626 = vpack.c.b16 %v402, %v398
  %v627 = vpack.c.b16 %v403, %v399
  %v628 = vpack.c.b16 %v404, %v400
  %v629 = vpack.c.b16 %v405, %v401
  %v630 = vpack.c.b16 %v410, %v406
  %v631 = vpack.c.b16 %v411, %v407
  %v632 = vpack.c.b16 %v412, %v408
  %v633 = vpack.c.b16 %v413, %v409
  %v634 = vpack.c.b16 %v418, %v414
  %v635 = vpack.c.b16 %v419, %v415
  %v636 = vpack.c.b16 %v420, %v416
  %v637 = vpack.c.b16 %v421, %v417
  %v638 = vpack.c.b16 %v426, %v422
  %v639 = vpack.c.b16 %v427, %v423
  %v640 = vpack.c.b16 %v428, %v424
  %v641 = vpack.c.b16 %v429, %v425
  %v642 = vpack.c.b16 %v434, %v430
  %v643 = vpack.c.b16 %v435, %v431
  %v644 = vpack.c.b16 %v436, %v432
  %v645 = vpack.c.b16 %v437, %v433
  %v646 = vpack.c.b16 %v442, %v438
  %v647 = vpack.c.b16 %v443, %v439
  %v648 = vpack.c.b16 %v444, %v440
  %v649 = vpack.c.b16 %v445, %v441
  %v650 = vpack.c.b16 %v450, %v446
  %v651 = vpack.c.b16 %v451, %v447
  %v652 = vpack.c.b16 %v452, %v448
  %v653 = vpack.c.b16 %v453, %v449
  %v654 = vpack.c.b16 %v458, %v454
  %v655 = vpack.c.b16 %v459, %v455
  %v656 = vpack.c.b16 %v460, %v456
  %v657 = vpack.c.b16 %v461, %v457
  %v658 = vpack.c.b16 %v466, %v462
  %v659 = vpack.c.b16 %v467, %v463
  %v660 = vpack.c.b16 %v468, %v464
  %v661 = vpack.c.b16 %v469, %v465
  %v662 = vpack.c.b16 %v474, %v470
  %v663 = vpack.c.b16 %v475, %v471
  %v664 = vpack.c.b16 %v476, %v472
  %v665 = vpack.c.b16 %v477, %v473
  %v666 = vpack.c.b16 %v482, %v478
  %v667 = vpack.c.b16 %v483, %v479
  %v668 = vpack.c.b16 %v484, %v480
  %v669 = vpack.c.b16 %v485, %v481
  %v670 = vpack.c.b16 %v490, %v486
  %v671 = vpack.c.b16 %v491, %v487
  %v672 = vpack.c.b16 %v492, %v488
  %v673 = vpack.c.b16 %v493, %v489
  %v674 = vpack.c.b16 %v498, %v494
  %v675 = vpack.c.b16 %v499, %v495
  %v676 = vpack.c.b16 %v500, %v496
  %v677 = vpack.c.b16 %v501, %v497
  %v678 = vpack.c.b16 %v506, %v502
  %v679 = vpack.c.b16 %v507, %v503
  %v680 = vpack.c.b16 %v508, %v504
  %v681 = vpack.c.b16 %v509, %v505
  %v682 = vpack.c.b16 %v514, %v510
  %v683 = vpack.c.b16 %v515, %v511
  %v684 = vpack.c.b16 %v516, %v512
  %v685 = vpack.c.b16 %v517, %v513
  %v686 = vpack.c.b16 %v522, %v518
  %v687 = vpack.c.b16 %v523, %v519
  %v688 = vpack.c.b16 %v524, %v520
  %v689 = vpack.c.b16 %v525, %v521
  %v690 = vpack.c.b16 %v530, %v526
  %v691 = vpack.c.b16 %v531, %v527
  %v692 = vpack.c.b16 %v532, %v528
  %v693 = vpack.c.b16 %v533, %v529
  %v694 = vpack.c.b16 %v538, %v534
  %v695 = vpack.c.b16 %v539, %v535
  %v696 = vpack.c.b16 %v540, %v536
  %v697 = vpack.c.b16 %v541, %v537
  %v698 = vpack.c.b16 %v546, %v542
  %v699 = vpack.c.b16 %v547, %v543
  %v700 = vpack.c.b16 %v548, %v544
  %v701 = vpack.c.b16 %v549, %v545
  %v702 = vpack.c.b16 %v554, %v550
  %v703 = vpack.c.b16 %v555, %v551
  %v704 = vpack.c.b16 %v556, %v552
  %v705 = vpack.c.b16 %v557, %v553
  %v706 = vpack.c.b16 %v562, %v558
  %v707 = vpack.c.b16 %v563, %v559
  %v708 = vpack.c.b16 %v564, %v560
  %v709 = vpack.c.b16 %v565, %v561
  %v710 = vpack.c.b16 %v570, %v566
  %v711 = vpack.c.b16 %v571, %v567
  %v712 = vpack.c.b16 %v572, %v568
  %v713 = vpack.c.b16 %v573, %v569
  %v714 = vpack.c.b16 %v578, %v574
  %v715 = vpack.c.b16 %v579, %v575
  %v716 = vpack.c.b16 %v580, %v576
  %v717 = vpack.c.b16 %v581, %v577
  %v718 = vpack.c.b16 %v586, %v582
  %v719 = vpack.c.b16 %v587, %v583
  %v720 = vpack.c.b16 %v588, %v584
  %v721 = vpack.c.b16 %v589, %v585
  %v722 = vpack.c.b16 %v594, %v590
  %v723 = vpack.c.b16 %v595, %v591
  %v724 = vpack.c.b16 %v596, %v592
  %v725 = vpack.c.b16 %v597, %v593
  %854 = vmatprep.subr.bf16.mxu0 %v599
  %855 = vmatpush1.bf16.msra.mxu0 %v598
  %856 = vmatprep.subr.bf16.mxu0 %v603
  %857 = vmatpush1.bf16.msra.mxu0 %v602
  %858 = vmatprep.subr.bf16.mxu0 %v607
  %859 = vmatpush1.bf16.msra.mxu0 %v606
  %860 = vmatprep.subr.bf16.mxu0 %v611
  %861 = vmatpush1.bf16.msra.mxu0 %v610
  %862 = vmatprep.subr.bf16.mxu0 %v615
  %863 = vmatpush1.bf16.msra.mxu0 %v614
  %864 = vmatprep.subr.bf16.mxu0 %v619
  %865 = vmatpush1.bf16.msra.mxu0 %v618
  %866 = vmatprep.subr.bf16.mxu0 %v623
  %867 = vmatpush1.bf16.msra.mxu0 %v622
  %868 = vmatprep.subr.bf16.mxu0 %v627
  %869 = vmatpush1.bf16.msra.mxu0 %v626
  %870 = vmatprep.subr.bf16.mxu0 %v631
  %871 = vmatpush1.bf16.msra.mxu0 %v630
  %872 = vmatprep.subr.bf16.mxu0 %v635
  %873 = vmatpush1.bf16.msra.mxu0 %v634
  %874 = vmatprep.subr.bf16.mxu0 %v639
  %875 = vmatpush1.bf16.msra.mxu0 %v638
  %876 = vmatprep.subr.bf16.mxu0 %v643
  %877 = vmatpush1.bf16.msra.mxu0 %v642
  %878 = vmatprep.subr.bf16.mxu0 %v647
  %879 = vmatpush1.bf16.msra.mxu0 %v646
  %880 = vmatprep.subr.bf16.mxu0 %v651
  %881 = vmatpush1.bf16.msra.mxu0 %v650
  %882 = vmatprep.subr.bf16.mxu0 %v655
  %883 = vmatpush1.bf16.msra.mxu0 %v654
  %884 = vmatprep.subr.bf16.mxu0 %v659
  %885 = vmatpush1.bf16.msra.mxu0 %v658
  %886 = vmatprep.mubr.bf16.mxu0 %v83
  %887 = vmatmul.mubr.bf16.gmra.mrb[0].mxu0 %v82
  %v888 = vpop.f32.mrb[0].mxu0
  %v889 = vadd.f32 0.0, %v888
  %v890 = vpop.f32.mrb[0].mxu0
  %v891 = vadd.f32 0.0, %v890
  %v892 = vpop.f32.mrb[0].mxu0
  %v893 = vpop.f32.mrb[0].mxu0
  %894 = vdwg.mxu0
  %895 = vmatprep.subr.bf16.mxu0 %v663
  %896 = vmatpush1.bf16.msra.mxu0 %v662
  %897 = vmatprep.subr.bf16.mxu0 %v667
  %898 = vmatpush1.bf16.msra.mxu0 %v666
  %899 = vmatprep.subr.bf16.mxu0 %v671
  %900 = vmatpush1.bf16.msra.mxu0 %v670
  %901 = vmatprep.subr.bf16.mxu0 %v675
  %902 = vmatpush1.bf16.msra.mxu0 %v674
  %903 = vmatprep.subr.bf16.mxu0 %v679
  %904 = vmatpush1.bf16.msra.mxu0 %v678
  %905 = vmatprep.subr.bf16.mxu0 %v683
  %906 = vmatpush1.bf16.msra.mxu0 %v682
  %907 = vmatprep.subr.bf16.mxu0 %v687
  %908 = vmatpush1.bf16.msra.mxu0 %v686
  %909 = vmatprep.subr.bf16.mxu0 %v691
  %910 = vmatpush1.bf16.msra.mxu0 %v690
  %911 = vmatprep.subr.bf16.mxu0 %v695
  %912 = vmatpush1.bf16.msra.mxu0 %v694
  %913 = vmatprep.subr.bf16.mxu0 %v699
  %914 = vmatpush1.bf16.msra.mxu0 %v698
  %915 = vmatprep.subr.bf16.mxu0 %v703
  %916 = vmatpush1.bf16.msra.mxu0 %v702
  %917 = vmatprep.subr.bf16.mxu0 %v707
  %918 = vmatpush1.bf16.msra.mxu0 %v706
  %919 = vmatprep.subr.bf16.mxu0 %v711
  %920 = vmatpush1.bf16.msra.mxu0 %v710
  %921 = vmatprep.subr.bf16.mxu0 %v715
  %922 = vmatpush1.bf16.msra.mxu0 %v714
  %923 = vmatprep.subr.bf16.mxu0 %v719
  %924 = vmatpush1.bf16.msra.mxu0 %v718
  %925 = vmatprep.subr.bf16.mxu0 %v723
  %926 = vmatpush1.bf16.msra.mxu0 %v722
  %927 = vmatprep.mubr.bf16.mxu0 %v85
  %928 = vmatmul.mubr.bf16.gmra.mrb[0].mxu0 %v84
  %v929 = vpop.f32.mrb[0].mxu0
  %v930 = vadd.f32 %v889, %v929
  %v931 = vpop.f32.mrb[0].mxu0
  %v932 = vadd.f32 %v891, %v931
  %v933 = vpop.f32.mrb[0].mxu0
  %v934 = vpop.f32.mrb[0].mxu0
  %935 = vdwg.mxu0
  %936 = vmatprep.subr.bf16.mxu0 %v601
  %937 = vmatpush1.bf16.msra.mxu0 %v600
  %938 = vmatprep.subr.bf16.mxu0 %v605
  %939 = vmatpush1.bf16.msra.mxu0 %v604
  %940 = vmatprep.subr.bf16.mxu0 %v609
  %941 = vmatpush1.bf16.msra.mxu0 %v608
  %942 = vmatprep.subr.bf16.mxu0 %v613
  %943 = vmatpush1.bf16.msra.mxu0 %v612
  %944 = vmatprep.subr.bf16.mxu0 %v617
  %945 = vmatpush1.bf16.msra.mxu0 %v616
  %946 = vmatprep.subr.bf16.mxu0 %v621
  %947 = vmatpush1.bf16.msra.mxu0 %v620
  %948 = vmatprep.subr.bf16.mxu0 %v625
  %949 = vmatpush1.bf16.msra.mxu0 %v624
  %950 = vmatprep.subr.bf16.mxu0 %v629
  %951 = vmatpush1.bf16.msra.mxu0 %v628
  %952 = vmatprep.subr.bf16.mxu0 %v633
  %953 = vmatpush1.bf16.msra.mxu0 %v632
  %954 = vmatprep.subr.bf16.mxu0 %v637
  %955 = vmatpush1.bf16.msra.mxu0 %v636
  %956 = vmatprep.subr.bf16.mxu0 %v641
  %957 = vmatpush1.bf16.msra.mxu0 %v640
  %958 = vmatprep.subr.bf16.mxu0 %v645
  %959 = vmatpush1.bf16.msra.mxu0 %v644
  %960 = vmatprep.subr.bf16.mxu0 %v649
  %961 = vmatpush1.bf16.msra.mxu0 %v648
  %962 = vmatprep.subr.bf16.mxu0 %v653
  %963 = vmatpush1.bf16.msra.mxu0 %v652
  %964 = vmatprep.subr.bf16.mxu0 %v657
  %965 = vmatpush1.bf16.msra.mxu0 %v656
  %966 = vmatprep.subr.bf16.mxu0 %v661
  %967 = vmatpush1.bf16.msra.mxu0 %v660
  %968 = vmatprep.mubr.bf16.mxu0 %v83
  %969 = vmatmul.mubr.bf16.gmra.mrb[0].mxu0 %v82
  %v970 = vpop.f32.mrb[0].mxu0
  %v971 = vadd.f32 0.0, %v970
  %v972 = vpop.f32.mrb[0].mxu0
  %v973 = vadd.f32 0.0, %v972
  %v974 = vpop.f32.mrb[0].mxu0
  %v975 = vpop.f32.mrb[0].mxu0
  %976 = vdwg.mxu0
  %977 = vmatprep.subr.bf16.mxu0 %v665
  %978 = vmatpush1.bf16.msra.mxu0 %v664
  %979 = vmatprep.subr.bf16.mxu0 %v669
  %980 = vmatpush1.bf16.msra.mxu0 %v668
  %981 = vmatprep.subr.bf16.mxu0 %v673
  %982 = vmatpush1.bf16.msra.mxu0 %v672
  %983 = vmatprep.subr.bf16.mxu0 %v677
  %984 = vmatpush1.bf16.msra.mxu0 %v676
  %985 = vmatprep.subr.bf16.mxu0 %v681
  %986 = vmatpush1.bf16.msra.mxu0 %v680
  %987 = vmatprep.subr.bf16.mxu0 %v685
  %988 = vmatpush1.bf16.msra.mxu0 %v684
  %989 = vmatprep.subr.bf16.mxu0 %v689
  %990 = vmatpush1.bf16.msra.mxu0 %v688
  %991 = vmatprep.subr.bf16.mxu0 %v693
  %992 = vmatpush1.bf16.msra.mxu0 %v692
  %993 = vmatprep.subr.bf16.mxu0 %v697
  %994 = vmatpush1.bf16.msra.mxu0 %v696
  %995 = vmatprep.subr.bf16.mxu0 %v701
  %996 = vmatpush1.bf16.msra.mxu0 %v700
  %997 = vmatprep.subr.bf16.mxu0 %v705
  %998 = vmatpush1.bf16.msra.mxu0 %v704
  %999 = vmatprep.subr.bf16.mxu0 %v709
  %1000 = vmatpush1.bf16.msra.mxu0 %v708
  %1001 = vmatprep.subr.bf16.mxu0 %v713
  %1002 = vmatpush1.bf16.msra.mxu0 %v712
  %1003 = vmatprep.subr.bf16.mxu0 %v717
  %1004 = vmatpush1.bf16.msra.mxu0 %v716
  %1005 = vmatprep.subr.bf16.mxu0 %v721
  %1006 = vmatpush1.bf16.msra.mxu0 %v720
  %1007 = vmatprep.subr.bf16.mxu0 %v725
  %1008 = vmatpush1.bf16.msra.mxu0 %v724
  %1009 = vmatprep.mubr.bf16.mxu0 %v85
  %1010 = vmatmul.mubr.bf16.gmra.mrb[0].mxu0 %v84
  %v1011 = vpop.f32.mrb[0].mxu0
  %v1012 = vadd.f32 %v971, %v1011
  %v1013 = vpop.f32.mrb[0].mxu0
  %v1014 = vadd.f32 %v973, %v1013
  %v1015 = vpop.f32.mrb[0].mxu0
  %v1016 = vpop.f32.mrb[0].mxu0
  %1017 = vdwg.mxu0
  %v1018 = vpack.c.bf16 %v930, %v930
  %v1019 = vpack.c.bf16 %v932, %v932
  %v1020 = vpack.c.bf16 %v1012, %v1012
  %v1021 = vpack.c.bf16 %v1014, %v1014
  %v1026 = vunpack.c.l.b16 %v1018
  %v1027 = vunpack.c.l.b16 %v1019
  %v1028 = vunpack.c.l.b16 %v1020
  %v1029 = vunpack.c.l.b16 %v1021
  %v1030 = vpack.c.b16 %v1027, %v1026
  %v1031 = vpack.c.b16 %v1029, %v1028
  %1034 = vst [vmem:[%s4] sm:$0xff] %v1030
  %1035 = vst [vmem:[%s4 + $0x8] sm:$0xff] %v1031
  %v1036 = vrot.slane %v930, 4
  %v1037 = vadd.f32 %v930, %v1036
  %v1038 = vrot.slane %v1037, 2
  %v1039 = vadd.f32 %v1037, %v1038
  %v1040 = vrot.slane %v1039, 1
  %v1041 = vadd.f32 %v1039, %v1040
  %v1042 = vrot.slane %v932, 4
  %v1043 = vadd.f32 %v932, %v1042
  %v1044 = vrot.slane %v1043, 2
  %v1045 = vadd.f32 %v1043, %v1044
  %v1046 = vrot.slane %v1045, 1
  %v1047 = vadd.f32 %v1045, %v1046
  %v1048 = vrot.slane %v1012, 4
  %v1049 = vadd.f32 %v1012, %v1048
  %v1050 = vrot.slane %v1049, 2
  %v1051 = vadd.f32 %v1049, %v1050
  %v1052 = vrot.slane %v1051, 1
  %v1053 = vadd.f32 %v1051, %v1052
  %v1054 = vrot.slane %v1014, 4
  %v1055 = vadd.f32 %v1014, %v1054
  %v1056 = vrot.slane %v1055, 2
  %v1057 = vadd.f32 %v1055, %v1056
  %v1058 = vrot.slane %v1057, 1
  %v1059 = vadd.f32 %v1057, %v1058
  %v1064 = vcombine.low %v1041, %v1047
  %v1065 = vcombine.low %v1053, %v1059
  %v1067 = vunpack.c.l.s4 1966171168
  %v1068 = vunpack.c.0.s8 %v1067
  %v1069 = vlaneseq
  %v1070 = vshrl.u32 %v1069, 7
  %v1071 = vsub.s32 %v1068, %v1070
  %v1072 = vrot.slane %v1064, %v1071
  %v1074 = vunpack.c.l.s4 1966171168
  %v1075 = vunpack.c.0.s8 %v1074
  %v1076 = vlaneseq
  %v1077 = vshrl.u32 %v1076, 7
  %v1078 = vsub.s32 %v1075, %v1077
  %v1079 = vrot.slane %v1065, %v1078
  %v1080 = vcombine.low %v1072, %v1079
  %v1082 = vunpack.c.l.s4 1966171168
  %v1083 = vunpack.c.0.s8 %v1082
  %v1084 = vlaneseq
  %v1085 = vshrl.u32 %v1084, 7
  %v1086 = vsub.s32 %v1083, %v1085
  %v1087 = vrot.slane %v1080, %v1086
  %v1089 = vlaneseq
  %vm1090 = vcmp.ge.s32.totalorder %v1089, 0
  %vm1091 = vcmp.lt.s32.totalorder %v1089, 512
  %vm1092 = vmand %vm1090, %vm1091
  %1093 = vst.msk [vmem:[%s5] sm:$0xf] %vm1092, %v1087
  %v1094 = vmul.f32 %v930, %v930
  %v1095 = vmul.f32 %v932, %v932
  %v1096 = vmul.f32 %v1012, %v1012
  %v1097 = vmul.f32 %v1014, %v1014
  %v1098 = vrot.slane %v1094, 4
  %v1099 = vadd.f32 %v1094, %v1098
  %v1100 = vrot.slane %v1099, 2
  %v1101 = vadd.f32 %v1099, %v1100
  %v1102 = vrot.slane %v1101, 1
  %v1103 = vadd.f32 %v1101, %v1102
  %v1104 = vrot.slane %v1095, 4
  %v1105 = vadd.f32 %v1095, %v1104
  %v1106 = vrot.slane %v1105, 2
  %v1107 = vadd.f32 %v1105, %v1106
  %v1108 = vrot.slane %v1107, 1
  %v1109 = vadd.f32 %v1107, %v1108
  %v1110 = vrot.slane %v1096, 4
  %v1111 = vadd.f32 %v1096, %v1110
  %v1112 = vrot.slane %v1111, 2
  %v1113 = vadd.f32 %v1111, %v1112
  %v1114 = vrot.slane %v1113, 1
  %v1115 = vadd.f32 %v1113, %v1114
  %v1116 = vrot.slane %v1097, 4
  %v1117 = vadd.f32 %v1097, %v1116
  %v1118 = vrot.slane %v1117, 2
  %v1119 = vadd.f32 %v1117, %v1118
  %v1120 = vrot.slane %v1119, 1
  %v1121 = vadd.f32 %v1119, %v1120
  %v1126 = vcombine.low %v1103, %v1109
  %v1127 = vcombine.low %v1115, %v1121
  %v1129 = vunpack.c.l.s4 1966171168
  %v1130 = vunpack.c.0.s8 %v1129
  %v1131 = vlaneseq
  %v1132 = vshrl.u32 %v1131, 7
  %v1133 = vsub.s32 %v1130, %v1132
  %v1134 = vrot.slane %v1126, %v1133
  %v1136 = vunpack.c.l.s4 1966171168
  %v1137 = vunpack.c.0.s8 %v1136
  %v1138 = vlaneseq
  %v1139 = vshrl.u32 %v1138, 7
  %v1140 = vsub.s32 %v1137, %v1139
  %v1141 = vrot.slane %v1127, %v1140
  %v1142 = vcombine.low %v1134, %v1141
  %v1144 = vunpack.c.l.s4 1966171168
  %v1145 = vunpack.c.0.s8 %v1144
  %v1146 = vlaneseq
  %v1147 = vshrl.u32 %v1146, 7
  %v1148 = vsub.s32 %v1145, %v1147
  %v1149 = vrot.slane %v1142, %v1148
  %1151 = vst.msk [vmem:[%s6] sm:$0xf] %vm1092, %v1149
  // Predicated region
  $region18: #{mine_t_forward.5} parent=0 // pred_check
    _
  $region19: #{mine_t_forward.5} parent=0 // pred_check_branch
    %1153 = sbr.rel (0) target = $region21
  $region20: #{mine_t_forward.5} parent=0 // pred_region
    _
  $region21: #{mine_t_forward.5} parent=0 // pred_fallthru
    _
  // Predicated region
  $region22: #{mine_t_forward.5} parent=0 // pred_check
    _
  $region23: #{mine_t_forward.5} parent=0 // pred_check_branch
    %1155 = sbr.rel (0) target = $region25
  $region24: #{mine_t_forward.5} parent=0 // pred_region
    _
  $region25: #{mine_t_forward.5} parent=0 // pred_fallthru
    _
  // Predicated region
  $region26: #{mine_t_forward.5} parent=0 // pred_check
    _
  $region27: #{mine_t_forward.5} parent=0 // pred_check_branch
    %1157 = sbr.rel (0) target = $region29
  $region28: #{mine_t_forward.5} parent=0 // pred_region
    _
  $region29: #{mine_t_forward.5} parent=0 // pred_fallthru
    _
  // Predicated region
  $region30: #{mine_t_forward.5} parent=0 // pred_check
    _
  $region31: #{mine_t_forward.5} parent=0 // pred_check_branch
    %1159 = sbr.rel (0) target = $region33
  $region32: #{mine_t_forward.5} parent=0 // pred_region
    _
  $region33: #{mine_t_forward.5} parent=0 // pred_fallthru
    _
  // Predicated region
  $region34: #{mine_t_forward.5} parent=0 // pred_check
    _
  $region35: #{mine_t_forward.5} parent=0 // pred_check_branch
    %1161 = sbr.rel (0) target = $region37
  $region36: #{mine_t_forward.5} parent=0 // pred_region
    _
  $region37: #{mine_t_forward.5} parent=0 // pred_fallthru
    _
  // Predicated region
  $region38: #{mine_t_forward.5} parent=0 // pred_check
    _
  $region39: #{mine_t_forward.5} parent=0 // pred_check_branch
    %1163 = sbr.rel (0) target = $region41
  $region40: #{mine_t_forward.5} parent=0 // pred_region
    _
  $region41: #{mine_t_forward.5} parent=0 // pred_fallthru
    _

// kernel: mine_t_forward.7
$region0: #{mine_t_forward.7}
  #allocation0 [shape = 'u32[]', space=smem, size = 0x4, offset = 0x4, fixed_abs, tag = 'smem constant byte address 0x4 - core index']
  #allocation1 [shape = 'u32[144,128]{1,0:T(1,128)}', space=vmem, size = 0x12000, scoped, tag = 'internal scratch']
  #allocation2 [shape = 'f32[1,1]{1,0:T(1,128)S(1)}', space=vmem, size = 0x200, scoped, tag = 'scoped memory for mine_t_forward.7']
  %s0 = inlined_call_operand.vmem [shape: bf16[8,512], index: 0, kind: input, shape index: {}]
  %s1 = inlined_call_operand.vmem [shape: f32[1,512], index: 1, kind: input, shape index: {}]
  %s2 = inlined_call_operand.vmem [shape: f32[1,512], index: 2, kind: input, shape index: {}]
  %s3 = inlined_call_operand.vmem [shape: f32[8,512], index: 3, kind: input, shape index: {}]
  %s4 = inlined_call_operand.<no memory space> [shape: f32[1,1], index: 4, kind: input, shape index: {}]
  %s5 = inlined_call_operand.vmem [shape: f32[1,8,8], index: 5, kind: output, shape index: {}]
  %s6 = sld [smem:[#allocation0]]
  $region30: #{mine_t_forward.7} parent=0
    _
  %s8 = ssub.s32 1, %s6
  %s9 = scalar_select 0, %s8, %s6
  %v10 = vstv %s4
  %11 = vst [vmem:[#allocation2] sm:$0x1] %v10
  // Predicated region
  $region2: #{mine_t_forward.7} parent=0 // pred_check
    _
  $region3: #{mine_t_forward.7} parent=0 // pred_check_branch
    %13 = sbr.rel (0) target = $region5
  $region4: #{mine_t_forward.7} parent=0 // pred_region
    _
  $region5: #{mine_t_forward.7} parent=0 // pred_fallthru
    _
  // Predicated region
  $region6: #{mine_t_forward.7} parent=0 // pred_check
    _
  $region7: #{mine_t_forward.7} parent=0 // pred_check_branch
    %15 = sbr.rel (0) target = $region9
  $region8: #{mine_t_forward.7} parent=0 // pred_region
    _
  $region9: #{mine_t_forward.7} parent=0 // pred_fallthru
    _
  // Predicated region
  $region10: #{mine_t_forward.7} parent=0 // pred_check
    _
  $region11: #{mine_t_forward.7} parent=0 // pred_check_branch
    %17 = sbr.rel (0) target = $region13
  $region12: #{mine_t_forward.7} parent=0 // pred_region
    _
  $region13: #{mine_t_forward.7} parent=0 // pred_fallthru
    _
  // Predicated region
  $region14: #{mine_t_forward.7} parent=0 // pred_check
    _
  $region15: #{mine_t_forward.7} parent=0 // pred_check_branch
    %19 = sbr.rel (0) target = $region17
  $region16: #{mine_t_forward.7} parent=0 // pred_region
    _
  $region17: #{mine_t_forward.7} parent=0 // pred_fallthru
    _
  // Predicated region
  $region18: #{mine_t_forward.7} parent=0 // pred_check
    _
  $region19: #{mine_t_forward.7} parent=0 // pred_check_branch
    %21 = sbr.rel (0) target = $region21
  $region20: #{mine_t_forward.7} parent=0 // pred_region
    _
  $region21: #{mine_t_forward.7} parent=0 // pred_fallthru
    _
  %v22 = vld [vmem:[%s0] sm:$0xff]
  %v23 = vld [vmem:[%s0 + $0x8] sm:$0xff]
  %v24 = vunpack.c.l.bf16 %v22
  %v25 = vunpack.c.h.bf16 %v22
  %v26 = vunpack.c.l.bf16 %v23
  %v27 = vunpack.c.h.bf16 %v23
  %v28 = vld [vmem:[%s1] sm:$0xf]
  %v30 = vlaneseq
  %v31 = vshrl.u32 %v30, 7
  %v32 = vsub.s32 0, %v31
  %v33 = vrot.slane %v28, %v32
  %v34 = vlaneseq
  %v35 = vshrl.u32 %v34, 7
  %v36 = vsub.s32 1, %v35
  %v37 = vrot.slane %v28, %v36
  %v38 = vlaneseq
  %v39 = vshrl.u32 %v38, 7
  %v40 = vsub.s32 2, %v39
  %v41 = vrot.slane %v28, %v40
  %v42 = vlaneseq
  %v43 = vshrl.u32 %v42, 7
  %v44 = vsub.s32 3, %v43
  %v45 = vrot.slane %v28, %v44
  %v50 = vmul.f32 %v24, %v33
  %v51 = vmul.f32 %v25, %v37
  %v52 = vmul.f32 %v26, %v41
  %v53 = vmul.f32 %v27, %v45
  %v54 = vld [vmem:[%s2] sm:$0xf]
  %v56 = vlaneseq
  %v57 = vshrl.u32 %v56, 7
  %v58 = vsub.s32 0, %v57
  %v59 = vrot.slane %v54, %v58
  %v60 = vlaneseq
  %v61 = vshrl.u32 %v60, 7
  %v62 = vsub.s32 1, %v61
  %v63 = vrot.slane %v54, %v62
  %v64 = vlaneseq
  %v65 = vshrl.u32 %v64, 7
  %v66 = vsub.s32 2, %v65
  %v67 = vrot.slane %v54, %v66
  %v68 = vlaneseq
  %v69 = vshrl.u32 %v68, 7
  %v70 = vsub.s32 3, %v69
  %v71 = vrot.slane %v54, %v70
  %v76 = vadd.f32 %v50, %v59
  %v77 = vadd.f32 %v51, %v63
  %v78 = vadd.f32 %v52, %v67
  %v79 = vadd.f32 %v53, %v71
  %v80 = vmax.f32 %v76, 0.0
  %v81 = vmax.f32 %v77, 0.0
  %v82 = vmax.f32 %v78, 0.0
  %v83 = vmax.f32 %v79, 0.0
  %v84 = vld [vmem:[%s3] sm:$0xff]
  %v85 = vld [vmem:[%s3 + $0x8] sm:$0xff]
  %v86 = vld [vmem:[%s3 + $0x10] sm:$0xff]
  %v87 = vld [vmem:[%s3 + $0x18] sm:$0xff]
  %v88 = vld [vmem:[#allocation2] sm:$0x1]
  %v90 = vlaneseq
  %v91 = vshrl.u32 %v90, 7
  %v92 = vsub.s32 0, %v91
  %v93 = vrot.slane %v88, %v92
  %94 = vset.pattern.permute.xlu0 0
  %95 = vperm.xlu0 %94, %v93
  %v96 = vpop.permute.xlu0 %95
  %98 = vmatprep.subr.mxu0 %v81
  %99 = vmatpush1.xpose.msra.mxu0 %v80
  %100 = vmatprep.subr.mxu0 0.0
  %101 = vmatpush1.xpose.msra.mxu0 0.0
  %102 = vmatprep.subr.mxu0 0.0
  %103 = vmatpush1.xpose.msra.mxu0 0.0
  %104 = vmatprep.subr.mxu0 0.0
  %105 = vmatpush1.xpose.msra.mxu0 0.0
  %106 = vmatprep.subr.mxu0 0.0
  %107 = vmatpush1.xpose.msra.mxu0 0.0
  %108 = vmatprep.subr.mxu0 0.0
  %109 = vmatpush1.xpose.msra.mxu0 0.0
  %110 = vmatprep.subr.mxu0 0.0
  %111 = vmatpush1.xpose.msra.mxu0 0.0
  %112 = vmatprep.subr.mxu0 0.0
  %113 = vmatpush1.xpose.msra.mxu0 0.0
  %114 = vmatprep.subr.mxu0 0.0
  %115 = vmatpush1.xpose.msra.mxu0 0.0
  %116 = vmatprep.subr.mxu0 0.0
  %117 = vmatpush1.xpose.msra.mxu0 0.0
  %118 = vmatprep.subr.mxu0 0.0
  %119 = vmatpush1.xpose.msra.mxu0 0.0
  %120 = vmatprep.subr.mxu0 0.0
  %121 = vmatpush1.xpose.msra.mxu0 0.0
  %122 = vmatprep.subr.mxu0 0.0
  %123 = vmatpush1.xpose.msra.mxu0 0.0
  %124 = vmatprep.subr.mxu0 0.0
  %125 = vmatpush1.xpose.msra.mxu0 0.0
  %126 = vmatprep.subr.mxu0 0.0
  %127 = vmatpush1.xpose.msra.mxu0 0.0
  %128 = vmatprep.subr.mxu0 0.0
  %129 = vmatpush1.xpose.msra.mxu0 0.0
  %130 = vmatprep.subr.mxu0 0.0
  %131 = vmatpush1.xpose.msra.mxu0 0.0
  %132 = vmatprep.subr.mxu0 0.0
  %133 = vmatpush1.xpose.msra.mxu0 0.0
  %134 = vmatprep.subr.mxu0 0.0
  %135 = vmatpush1.xpose.msra.mxu0 0.0
  %136 = vmatprep.subr.mxu0 0.0
  %137 = vmatpush1.xpose.msra.mxu0 0.0
  %138 = vmatprep.subr.mxu0 0.0
  %139 = vmatpush1.xpose.msra.mxu0 0.0
  %140 = vmatprep.subr.mxu0 0.0
  %141 = vmatpush1.xpose.msra.mxu0 0.0
  %142 = vmatprep.subr.mxu0 0.0
  %143 = vmatpush1.xpose.msra.mxu0 0.0
  %144 = vmatprep.subr.mxu0 0.0
  %145 = vmatpush1.xpose.msra.mxu0 0.0
  %146 = vmatprep.subr.mxu0 0.0
  %147 = vmatpush1.xpose.msra.mxu0 0.0
  %148 = vmatprep.subr.mxu0 0.0
  %149 = vmatpush1.xpose.msra.mxu0 0.0
  %150 = vmatprep.subr.mxu0 0.0
  %151 = vmatpush1.xpose.msra.mxu0 0.0
  %152 = vmatprep.subr.mxu0 0.0
  %153 = vmatpush1.xpose.msra.mxu0 0.0
  %154 = vmatprep.subr.mxu0 0.0
  %155 = vmatpush1.xpose.msra.mxu0 0.0
  %156 = vmatprep.subr.mxu0 0.0
  %157 = vmatpush1.xpose.msra.mxu0 0.0
  %158 = vmatprep.subr.mxu0 0.0
  %159 = vmatpush1.xpose.msra.mxu0 0.0
  %160 = vmatprep.subr.mxu0 0.0
  %161 = vmatpush1.xpose.msra.mxu0 0.0
  %162 = vmatprep.mubr.f32.mxu0 %v85
  %163 = vmatmul.mubr.f32.gmra.mrb[0].mxu0 %v84
  %v164 = vpop.f32.mrb[0].mxu0
  %v165 = vadd.f32 %v96, %v164
  %v166 = vpop.f32.mrb[0].mxu0
  %167 = vdwg.mxu0
  %168 = vmatprep.subr.mxu0 %v83
  %169 = vmatpush1.xpose.msra.mxu0 %v82
  %170 = vmatprep.subr.mxu0 0.0
  %171 = vmatpush1.xpose.msra.mxu0 0.0
  %172 = vmatprep.subr.mxu0 0.0
  %173 = vmatpush1.xpose.msra.mxu0 0.0
  %174 = vmatprep.subr.mxu0 0.0
  %175 = vmatpush1.xpose.msra.mxu0 0.0
  %176 = vmatprep.subr.mxu0 0.0
  %177 = vmatpush1.xpose.msra.mxu0 0.0
  %178 = vmatprep.subr.mxu0 0.0
  %179 = vmatpush1.xpose.msra.mxu0 0.0
  %180 = vmatprep.subr.mxu0 0.0
  %181 = vmatpush1.xpose.msra.mxu0 0.0
  %182 = vmatprep.subr.mxu0 0.0
  %183 = vmatpush1.xpose.msra.mxu0 0.0
  %184 = vmatprep.subr.mxu0 0.0
  %185 = vmatpush1.xpose.msra.mxu0 0.0
  %186 = vmatprep.subr.mxu0 0.0
  %187 = vmatpush1.xpose.msra.mxu0 0.0
  %188 = vmatprep.subr.mxu0 0.0
  %189 = vmatpush1.xpose.msra.mxu0 0.0
  %190 = vmatprep.subr.mxu0 0.0
  %191 = vmatpush1.xpose.msra.mxu0 0.0
  %192 = vmatprep.subr.mxu0 0.0
  %193 = vmatpush1.xpose.msra.mxu0 0.0
  %194 = vmatprep.subr.mxu0 0.0
  %195 = vmatpush1.xpose.msra.mxu0 0.0
  %196 = vmatprep.subr.mxu0 0.0
  %197 = vmatpush1.xpose.msra.mxu0 0.0
  %198 = vmatprep.subr.mxu0 0.0
  %199 = vmatpush1.xpose.msra.mxu0 0.0
  %200 = vmatprep.subr.mxu0 0.0
  %201 = vmatpush1.xpose.msra.mxu0 0.0
  %202 = vmatprep.subr.mxu0 0.0
  %203 = vmatpush1.xpose.msra.mxu0 0.0
  %204 = vmatprep.subr.mxu0 0.0
  %205 = vmatpush1.xpose.msra.mxu0 0.0
  %206 = vmatprep.subr.mxu0 0.0
  %207 = vmatpush1.xpose.msra.mxu0 0.0
  %208 = vmatprep.subr.mxu0 0.0
  %209 = vmatpush1.xpose.msra.mxu0 0.0
  %210 = vmatprep.subr.mxu0 0.0
  %211 = vmatpush1.xpose.msra.mxu0 0.0
  %212 = vmatprep.subr.mxu0 0.0
  %213 = vmatpush1.xpose.msra.mxu0 0.0
  %214 = vmatprep.subr.mxu0 0.0
  %215 = vmatpush1.xpose.msra.mxu0 0.0
  %216 = vmatprep.subr.mxu0 0.0
  %217 = vmatpush1.xpose.msra.mxu0 0.0
  %218 = vmatprep.subr.mxu0 0.0
  %219 = vmatpush1.xpose.msra.mxu0 0.0
  %220 = vmatprep.subr.mxu0 0.0
  %221 = vmatpush1.xpose.msra.mxu0 0.0
  %222 = vmatprep.subr.mxu0 0.0
  %223 = vmatpush1.xpose.msra.mxu0 0.0
  %224 = vmatprep.subr.mxu0 0.0
  %225 = vmatpush1.xpose.msra.mxu0 0.0
  %226 = vmatprep.subr.mxu0 0.0
  %227 = vmatpush1.xpose.msra.mxu0 0.0
  %228 = vmatprep.subr.mxu0 0.0
  %229 = vmatpush1.xpose.msra.mxu0 0.0
  %230 = vmatprep.subr.mxu0 0.0
  %231 = vmatpush1.xpose.msra.mxu0 0.0
  %232 = vmatprep.mubr.f32.mxu0 %v87
  %233 = vmatmul.mubr.f32.gmra.mrb[0].mxu0 %v86
  %v234 = vpop.f32.mrb[0].mxu0
  %v235 = vadd.f32 %v165, %v234
  %v236 = vpop.f32.mrb[0].mxu0
  %237 = vdwg.mxu0
  %vm238 = vcmask 64512
  %239 = vst.msk [vmem:[%s5] sm:$0xff] %vm238, %v235
  // Predicated region
  $region22: #{mine_t_forward.7} parent=0 // pred_check
    _
  $region23: #{mine_t_forward.7} parent=0 // pred_check_branch
    %241 = sbr.rel (0) target = $region25
  $region24: #{mine_t_forward.7} parent=0 // pred_region
    _
  $region25: #{mine_t_forward.7} parent=0 // pred_fallthru
    _
  // Predicated region
  $region26: #{mine_t_forward.7} parent=0 // pred_check
    _
  $region27: #{mine_t_forward.7} parent=0 // pred_check_branch
    %243 = sbr.rel (0) target = $region29
  $region28: #{mine_t_forward.7} parent=0 // pred_region
    _
  $region29: #{mine_t_forward.7} parent=0 // pred_fallthru
    _

</llo_original>
